<compile_context>
chip_gen: v7x
topology: tpu7x:2x2x1
jax: 0.10.0
libtpu: 0.0.40
codegen_flags: <defaults>
</compile_context>

<pallas_src>
import jax
import jax.numpy as jnp
from jax.experimental import pallas as pl
from jax.experimental.pallas import tpu as pltpu


_VMEM_BUDGET_BYTES = 40 * 1024 * 1024  # double-buffered in+out budget (v7x-safe)


def _choose_channel_block(C, H, W, itemsize, budget_bytes=_VMEM_BUDGET_BYTES):
    """Largest divisor of C whose double-buffered in+out blocks fit the budget."""
    # Per output channel: input 4*H*W + output 4*H*W elements, x2 (double buffer).
    per_chan = 16 * H * W * itemsize
    cap = max(1, budget_bytes // per_chan)
    if cap >= C:
        return C
    cb = 1
    for d in range(1, int(cap) + 1):
        if C % d == 0:
            cb = d
    return cb


def sp_net_forward(x):
    """PixelShuffle(2) on an NCHW tensor via a Pallas TPU kernel."""
    N, C4, H, W = x.shape
    if C4 % 4 != 0:
        raise ValueError("PixelShuffle(2) requires channels divisible by 4")
    C = C4 // 4
    itemsize = jnp.dtype(x.dtype).itemsize
    CB = _choose_channel_block(C, H, W, itemsize)
    grid = (N, C // CB)

    def kernel(x_ref, o_ref):
        # x_ref: (1, 4*CB, H, W)   -> the 4 sub-channels of CB output channels
        # o_ref: (1, CB, H, 4*W)   -> row-pair-packed output slab
        xb = x_ref[0].reshape(CB, 4, H, W)      # leading-dim split: no relayout
        a00 = xb[:, 0]                          # -> out rows 2h,   cols 2w
        a01 = xb[:, 1]                          # -> out rows 2h,   cols 2w+1
        a10 = xb[:, 2]                          # -> out rows 2h+1, cols 2w
        a11 = xb[:, 3]                          # -> out rows 2h+1, cols 2w+1
        # Lane interleave along W (RoPE-style stack+merge of last two dims).
        top = jnp.stack([a00, a01], axis=-1).reshape(CB, H, 2 * W)  # even rows
        bot = jnp.stack([a10, a11], axis=-1).reshape(CB, H, 2 * W)  # odd rows
        # Row-pair packing: [even | odd] along lanes; the wrapper's free
        # reshape turns lane-slot i*2W+m into output row 2h+i, col m.
        o_ref[0] = jnp.concatenate([top, bot], axis=-1)             # (CB, H, 4W)

    vmem_need = 2 * (4 * CB * H * W + CB * H * 4 * W) * itemsize  # dbl-buffered
    vmem_limit = int(min(max(2 * vmem_need, 32 << 20), 48 << 20))

    out_packed = pl.pallas_call(
        kernel,
        out_shape=jax.ShapeDtypeStruct((N, C, H, 4 * W), x.dtype),
        grid=grid,
        in_specs=[
            # block index cb along the channel axis selects channels
            # [4*CB*cb, 4*CB*(cb+1)); last two block dims are full -> always legal.
            pl.BlockSpec((1, 4 * CB, H, W), lambda n, cb: (n, cb, 0, 0)),
        ],
        out_specs=pl.BlockSpec((1, CB, H, 4 * W), lambda n, cb: (n, cb, 0, 0)),
        compiler_params=pltpu.CompilerParams(
            dimension_semantics=("parallel", "parallel"),
            vmem_limit_bytes=vmem_limit,
        ),
        cost_estimate=pl.CostEstimate(
            flops=0,
            transcendentals=0,
            bytes_accessed=2 * N * C4 * H * W * itemsize,
        ),
    )(x)

    # Free contiguous reshape: (N, C, H, 4W) row-pair packing -> (N, C, 2H, 2W).
    return out_packed.reshape(N, C, 2 * H, 2 * W)


def _pixel_shuffle2_ref(x):
    # Pure-JAX reference matching torch.nn.PixelShuffle(2) semantics.
    N, C4, H, W = x.shape
    C = C4 // 4
    y = x.reshape(N, C, 2, 2, H, W)
    y = jnp.transpose(y, (0, 1, 4, 2, 5, 3))  # (N, C, H, 2, W, 2)
    return y.reshape(N, C, 2 * H, 2 * W)


if __name__ == "__main__":
    key = jax.random.PRNGKey(0)

    # Primary case (matches the SPNet spec scale): (2, 4, 16, 16) f32.
    x = jax.random.normal(key, (2, 4, 16, 16), dtype=jnp.float32)
    out = jax.block_until_ready(sp_net_forward(x))
    ref = _pixel_shuffle2_ref(x)
    assert out.shape == (2, 1, 32, 32), out.shape
    assert jnp.array_equal(out, ref), "Pallas pixel-shuffle mismatch (base case)"

    # Multi-channel case: exercises the channel-folded (CB > 1) path.
    x2 = jax.random.normal(jax.random.PRNGKey(1), (2, 16, 16, 16),
                           dtype=jnp.float32)
    out2 = jax.block_until_ready(sp_net_forward(x2))
    assert out2.shape == (2, 4, 32, 32), out2.shape
    assert jnp.array_equal(out2, _pixel_shuffle2_ref(x2)), \
        "Pallas pixel-shuffle mismatch (multi-channel case)"

    # Non-multiple-of-8 spatial height (flagged in review).
    x3 = jax.random.normal(jax.random.PRNGKey(2), (1, 8, 10, 16),
                           dtype=jnp.float32)
    out3 = jax.block_until_ready(sp_net_forward(x3))
    assert out3.shape == (1, 2, 20, 32), out3.shape
    assert jnp.array_equal(out3, _pixel_shuffle2_ref(x3)), \
        "Pallas pixel-shuffle mismatch (odd-H case)"

    print("KERNEL_OK")
</pallas_src>

<mosaic_0001>
module attributes {stable_mosaic.version = 11 : i64} {
  func.func @kernel(%arg0: i32, %arg1: i32, %arg2: memref<1x4x16x16xf32, #tpu.memory_space<vmem>>, %arg3: memref<1x1x16x64xf32, #tpu.memory_space<vmem>>) attributes {dimension_semantics = [#tpu.dimension_semantics<parallel>, #tpu.dimension_semantics<parallel>], iteration_bounds = array<i64: 2, 1>, scalar_prefetch = 0 : i64, scratch_operands = 0 : i64, tpu.core_type = #tpu.core_type<tc>, window_params = [{transform_indices = @transform_0, window_bounds = array<i64: 1, 4, 16, 16>}, {transform_indices = @transform_1, window_bounds = array<i64: 1, 1, 16, 64>}]} {
    %c0 = arith.constant 0 : index
    %c0_0 = arith.constant 0 : index
    %c0_1 = arith.constant 0 : index
    %c0_2 = arith.constant 0 : index
    %0 = vector.load %arg2[%c0, %c0_0, %c0_1, %c0_2] : memref<1x4x16x16xf32, #tpu.memory_space<vmem>>, vector<1x4x16x16xf32>
    %1 = vector.shape_cast %0 : vector<1x4x16x16xf32> to vector<4x16x16xf32>
    %2 = vector.shape_cast %1 : vector<4x16x16xf32> to vector<1x4x16x16xf32>
    %3 = vector.extract_strided_slice %2 {offsets = [0, 0, 0, 0], sizes = [1, 1, 16, 16], strides = [1, 1, 1, 1]} : vector<1x4x16x16xf32> to vector<1x1x16x16xf32>
    %4 = vector.shape_cast %3 : vector<1x1x16x16xf32> to vector<1x16x16xf32>
    %5 = vector.extract_strided_slice %2 {offsets = [0, 1, 0, 0], sizes = [1, 1, 16, 16], strides = [1, 1, 1, 1]} : vector<1x4x16x16xf32> to vector<1x1x16x16xf32>
    %6 = vector.shape_cast %5 : vector<1x1x16x16xf32> to vector<1x16x16xf32>
    %7 = vector.extract_strided_slice %2 {offsets = [0, 2, 0, 0], sizes = [1, 1, 16, 16], strides = [1, 1, 1, 1]} : vector<1x4x16x16xf32> to vector<1x1x16x16xf32>
    %8 = vector.shape_cast %7 : vector<1x1x16x16xf32> to vector<1x16x16xf32>
    %9 = vector.extract_strided_slice %2 {offsets = [0, 3, 0, 0], sizes = [1, 1, 16, 16], strides = [1, 1, 1, 1]} : vector<1x4x16x16xf32> to vector<1x1x16x16xf32>
    %10 = vector.shape_cast %9 : vector<1x1x16x16xf32> to vector<1x16x16xf32>
    %11 = vector.shape_cast %4 : vector<1x16x16xf32> to vector<1x16x16x1xf32>
    %12 = vector.shape_cast %6 : vector<1x16x16xf32> to vector<1x16x16x1xf32>
    %13 = tpu.concatenate %11, %12 in 3 : vector<1x16x16x1xf32>, vector<1x16x16x1xf32> -> vector<1x16x16x2xf32>
    %14 = vector.shape_cast %13 : vector<1x16x16x2xf32> to vector<1x16x32xf32>
    %15 = vector.shape_cast %8 : vector<1x16x16xf32> to vector<1x16x16x1xf32>
    %16 = vector.shape_cast %10 : vector<1x16x16xf32> to vector<1x16x16x1xf32>
    %17 = tpu.concatenate %15, %16 in 3 : vector<1x16x16x1xf32>, vector<1x16x16x1xf32> -> vector<1x16x16x2xf32>
    %18 = vector.shape_cast %17 : vector<1x16x16x2xf32> to vector<1x16x32xf32>
    %19 = tpu.concatenate %14, %18 in 2 : vector<1x16x32xf32>, vector<1x16x32xf32> -> vector<1x16x64xf32>
    %c0_3 = arith.constant 0 : index
    %c0_4 = arith.constant 0 : index
    %c0_5 = arith.constant 0 : index
    %c0_6 = arith.constant 0 : index
    %20 = vector.load %arg3[%c0_3, %c0_4, %c0_5, %c0_6] : memref<1x1x16x64xf32, #tpu.memory_space<vmem>>, vector<1x1x16x64xf32>
    %21 = vector.shape_cast %20 : vector<1x1x16x64xf32> to vector<1x16x64xf32>
    %22 = vector.shape_cast %19 : vector<1x16x64xf32> to vector<1x1x16x64xf32>
    tpu.vector_store %arg3[%c0_3, %c0_4, %c0_5, %c0_6], %22 {strides = array<i32>} : memref<1x1x16x64xf32, #tpu.memory_space<vmem>>, vector<1x1x16x64xf32>,
    return
  }
  func.func @transform_0(%arg0: i32, %arg1: i32) -> (i32, i32, i32, i32) {
    %c0_i32 = arith.constant 0 : i32
    %c0_i32_0 = arith.constant 0 : i32
    %c0_i32_1 = arith.constant 0 : i32
    return %arg0, %arg1, %c0_i32, %c0_i32_0 : i32, i32, i32, i32
  }
  func.func @transform_1(%arg0: i32, %arg1: i32) -> (i32, i32, i32, i32) {
    %c0_i32 = arith.constant 0 : i32
    %c0_i32_0 = arith.constant 0 : i32
    %c0_i32_1 = arith.constant 0 : i32
    return %arg0, %arg1, %c0_i32, %c0_i32_0 : i32, i32, i32, i32
  }
}

</mosaic_0001>

<llo_original>
// kernel: tpu_custom_call.1
$region0: #{tpu_custom_call.1}
  #allocation0 [shape = 'u32[]', space=smem, size = 0x4, offset = 0x4, fixed_abs, tag = 'smem constant byte address 0x4 - core index']
  #allocation1 [shape = 'u32[144,128]{1,0:T(1,128)}', space=vmem, size = 0x12000, scoped, tag = 'internal scratch']
  %s0 = inlined_call_operand.hbm [shape: f32[2,4,16,16], index: 0, kind: input, shape index: {}]
  %s1 = inlined_call_operand.hbm [shape: f32[2,1,16,64], index: 1, kind: output, shape index: {}]
  %s2 = sld [smem:[#allocation0]]
  $region41: #{tpu_custom_call.1} parent=0
    _
  %s4 = ssub.s32 1, %s2
  %s5 = scalar_select 0, %s4, %s2
  $region1: #{tpu_custom_call.1} parent=0
    #allocation2 [shape = 'u8[65536]{0}', space=vmem, size = 0x10000, scoped, tag = 'input window, operand 0']
    #allocation3 [shape = 's32[2]{0}', space=sflag, size = 0x8, scoped, tag = 'scoped memory for tpu_custom_call.1']
    #allocation4 [shape = 's32[2]{0}', space=sflag, size = 0x8, scoped, tag = 'scoped memory for tpu_custom_call.1']
    #allocation5 [shape = 'u8[16384]{0}', space=vmem, size = 0x4000, scoped, tag = 'output window, operand 0']
    %6 = vsyncpa [#allocation3], 0
    %s7 = scalar_lea.sflag [#allocation3], 1
    %8 = vsyncpa %s7, 0
    %9 = vsyncpa [#allocation4], 0
    %s10 = scalar_lea.sflag [#allocation4], 1
    %11 = vsyncpa %s10, 0
    loop: start=0, step=1, limit=4
    $region2: #{tpu_custom_call.1} parent=1 // loop_pre_header
      _
    $region3: #{tpu_custom_call.1} parent=1 // loop_header
      %s13 = sphi 0, %s17
      %p14 = scmp.ge.s32.totalorder %s13, 4
      %s20 = sphi 0, %s32
      %s21 = sphi 0, %s28
      %s22 = sphi 0, %s20
      %s23 = sphi 0, %s21
      %s24 = sphi 0, %s22
      %s25 = sphi 0, %s23
      %s37 = sphi 0, %s39
      %s40 = sphi 0, %s37
      %s41 = sphi 0, %s40
      %s57 = sphi 0, %s41
      %s65 = sphi 0, %s67
      %s68 = sphi 0, %s65
      %s69 = sphi 0, %s68
      %s85 = sphi 0, %s69
    $region4: #{tpu_custom_call.1} parent=1 // loop_header_branch
      %16 = sbr.rel (%p14) target = $region8
    $region5: #{tpu_custom_call.1} parent=1 // loop_body
      %s18 = ssub.s32 %s13, 1
      %s19 = ssub.s32 %s13, 2
      %s26 = sadd.s32 1, %s21
      %p27 = scmp.ge.s32.totalorder %s26, 1
      %s28 = scalar_select %p27, 0, %s26
      %s29 = sadd.s32 1, %s20
      %s30 = scalar_select %p27, %s29, %s20
      %p31 = scmp.ge.s32.totalorder %s30, 2
      %s32 = scalar_select %p31, 0, %s30
      %s33 = ssub.s32 %s20, %s32
      %s34 = ssub.s32 %s21, %s28
      %s35 = sor.u32 %s33, %s34
      %p36 = scmp.eq.s32.totalorder %s35, 0
      %s38 = sadd.s32 %s37, 1
      %s39 = scalar_select %p36, %s37, %s38
      %p42 = pneg %p36
      %p43 = scmp.eq.s32.totalorder %s13, 1
      %p44 = por %p42, %p43
      %p45 = scmp.ne.s32.totalorder %s37, %s40
      %p46 = scmp.eq.s32.totalorder %s13, 0
      %p47 = por %p45, %p46
      %p48 = scmp.ne.s32.totalorder %s37, %s40
      %p49 = scmp.eq.s32.totalorder %s18, 1
      %p50 = por %p48, %p49
      %p51 = scmp.ne.s32.totalorder %s40, %s41
      %p52 = scmp.eq.s32.totalorder %s18, 0
      %p53 = por %p51, %p52
      %p54 = scmp.ne.s32.totalorder %s40, %s41
      %p55 = scmp.eq.s32.totalorder %s19, 1
      %p56 = por %p54, %p55
      %p58 = scmp.ne.s32.totalorder %s41, %s57
      %p59 = scmp.eq.s32.totalorder %s19, 0
      %p60 = por %p58, %p59
      %s61 = ssub.s32 %s20, %s32
      %s62 = ssub.s32 %s21, %s28
      %s63 = sor.u32 %s61, %s62
      %p64 = scmp.eq.s32.totalorder %s63, 0
      %s66 = sadd.s32 %s65, 1
      %s67 = scalar_select %p64, %s65, %s66
      %p70 = pneg %p64
      %p71 = scmp.eq.s32.totalorder %s13, 1
      %p72 = por %p70, %p71
      %p73 = scmp.ne.s32.totalorder %s65, %s68
      %p74 = scmp.eq.s32.totalorder %s13, 0
      %p75 = por %p73, %p74
      %p76 = scmp.ne.s32.totalorder %s65, %s68
      %p77 = scmp.eq.s32.totalorder %s18, 1
      %p78 = por %p76, %p77
      %p79 = scmp.ne.s32.totalorder %s68, %s69
      %p80 = scmp.eq.s32.totalorder %s18, 0
      %p81 = por %p79, %p80
      %p82 = scmp.ne.s32.totalorder %s68, %s69
      %p83 = scmp.eq.s32.totalorder %s19, 1
      %p84 = por %p82, %p83
      %p86 = scmp.ne.s32.totalorder %s69, %s85
      %p87 = scmp.eq.s32.totalorder %s19, 0
      %p88 = por %p86, %p87
      %p89 = scmp.le.s32.totalorder 1, %s13
      %p90 = scmp.lt.s32.totalorder %s13, 3
      %p91 = pnand %p89, %p90
      %p92 = pneg %p91
      // Predicated region
      $region9: #{tpu_custom_call.1} parent=5 // pred_check
        _
      $region10: #{tpu_custom_call.1} parent=5 // pred_check_branch
        %94 = sbr.rel (%p91) target = $region12
      $region11: #{tpu_custom_call.1} parent=5 // pred_region
        %s95 = ssub.s32 %s13, 1
      $region12: #{tpu_custom_call.1} parent=5 // pred_fallthru
        _
      %p96 = scmp.lt.s32.totalorder %s13, 2
      // Predicated region
      $region13: #{tpu_custom_call.1} parent=5 // pred_check
        %p97 = pneg %p96
      $region14: #{tpu_custom_call.1} parent=5 // pred_check_branch
        %99 = sbr.rel (%p97) target = $region16
      $region15: #{tpu_custom_call.1} parent=5 // pred_region
        // Predicated region
        $region17: #{tpu_custom_call.1} parent=15 // pred_check
          %p100 = pneg %p47
        $region18: #{tpu_custom_call.1} parent=15 // pred_check_branch
          %102 = sbr.rel (%p100) target = $region20
        $region19: #{tpu_custom_call.1} parent=15 // pred_region
          %s103 = sand.u32 %s37, 1
          %s104 = scalar_lea.sflag [#allocation3], %s103
          %s105 = sand.u32 %s37, 1
          %s106 = smul.addr %s105, 64
          %s107 = scalar_lea.vmem [#allocation2], %s106
          %s108 = smul.u32 4, %s21
          %s110 = ssub.s32 1024, 1024
          %111 = vsyncadd %s104, %s110
          %s112 = smul.addr %s108, 2
          %s113 = smul.addr %s20, 8
          %s114 = sadd.s32 %s112, %s113
          %s115 = smul.addr %s114, 128
          %s116 = scalar_lea.hbm %s0, %s115
          %s117 = sshll.u32 %s107, 4
          %s118 = int_to_ptr.vmem [resolvable:$true] %s117
          %123 = dma.hbm_to_vmem [thread:$0]  %s116, 1024, %s118, %s104, 128, 128, 8
        $region20: #{tpu_custom_call.1} parent=15 // pred_fallthru
          _
      $region16: #{tpu_custom_call.1} parent=5 // pred_fallthru
        _
      %p124 = scmp.le.s32.totalorder 1, %s13
      %p125 = scmp.lt.s32.totalorder %s13, 3
      %p126 = pnand %p124, %p125
      %p127 = pneg %p126
      // Predicated region
      $region21: #{tpu_custom_call.1} parent=5 // pred_check
        _
      $region22: #{tpu_custom_call.1} parent=5 // pred_check_branch
        %129 = sbr.rel (%p126) target = $region24
      $region23: #{tpu_custom_call.1} parent=5 // pred_region
        %s130 = ssub.s32 %s13, 1
        %s131 = sand.u32 %s40, 1
        %s132 = scalar_lea.sflag [#allocation3], %s131
        %s133 = sand.u32 %s40, 1
        %s134 = smul.addr %s133, 64
        %s135 = scalar_lea.vmem [#allocation2], %s134
        // Predicated region
        $region25: #{tpu_custom_call.1} parent=23 // pred_check
          %p136 = pneg %p53
        $region26: #{tpu_custom_call.1} parent=23 // pred_check_branch
          %138 = sbr.rel (%p136) target = $region28
        $region27: #{tpu_custom_call.1} parent=23 // pred_region
          %139 = dma.done %s132, 1024
        $region28: #{tpu_custom_call.1} parent=23 // pred_fallthru
          _
        %s140 = sand.u32 %s40, 1
        %s141 = scalar_lea.sflag [#allocation3], %s140
        %s142 = sand.u32 %s40, 1
        %s143 = smul.addr %s142, 64
        %s144 = scalar_lea.vmem [#allocation2], %s143
        %p145 = pneg %p53
        %p146 = pneg %p50
        %p147 = pneg %p81
        %p148 = pneg %p78
        %s149 = sand.u32 %s68, 1
        %s150 = scalar_lea.sflag [#allocation4], %s149
        %s151 = sand.u32 %s68, 1
        %s152 = smul.addr %s151, 16
        %s153 = scalar_lea.vmem [#allocation5], %s152
        %s154 = smul.u32 4, %s23
        %v155 = vld [vmem:[%s135] sm:$0xff]
        %v156 = vld [vmem:[%s135 + $0x8] sm:$0xff]
        %v157 = vld [vmem:[%s135 + $0x10] sm:$0xff]
        %v158 = vld [vmem:[%s135 + $0x18] sm:$0xff]
        %v159 = vld [vmem:[%s135 + $0x20] sm:$0xff]
        %v160 = vld [vmem:[%s135 + $0x28] sm:$0xff]
        %v161 = vld [vmem:[%s135 + $0x30] sm:$0xff]
        %v162 = vld [vmem:[%s135 + $0x38] sm:$0xff]
        %v163 = vlaneseq
        %v164 = vshrl.u32 %v163, 7
        %v165 = vsub.s32 0, %v164
        %v166 = vrot.slane %v155, %v165
        %168 = vbcast.lane.b32.xlu0 %v166, 256
        %v169 = vpop.permute.xlu0 %168
        %s171 = sor.u32 256, 8
        %172 = vbcast.lane.b32.xlu0 %v166, %s171
        %v173 = vpop.permute.xlu0 %172
        %v174 = vlaneseq
        %v175 = vshrl.u32 %v174, 7
        %v176 = vsub.s32 1, %v175
        %v177 = vrot.slane %v155, %v176
        %179 = vbcast.lane.b32.xlu0 %v177, 256
        %v180 = vpop.permute.xlu0 %179
        %s182 = sor.u32 256, 8
        %183 = vbcast.lane.b32.xlu0 %v177, %s182
        %v184 = vpop.permute.xlu0 %183
        %v185 = vlaneseq
        %v186 = vshrl.u32 %v185, 7
        %v187 = vsub.s32 2, %v186
        %v188 = vrot.slane %v155, %v187
        %190 = vbcast.lane.b32.xlu0 %v188, 256
        %v191 = vpop.permute.xlu0 %190
        %s193 = sor.u32 256, 8
        %194 = vbcast.lane.b32.xlu0 %v188, %s193
        %v195 = vpop.permute.xlu0 %194
        %v196 = vlaneseq
        %v197 = vshrl.u32 %v196, 7
        %v198 = vsub.s32 3, %v197
        %v199 = vrot.slane %v155, %v198
        %201 = vbcast.lane.b32.xlu0 %v199, 256
        %v202 = vpop.permute.xlu0 %201
        %s204 = sor.u32 256, 8
        %205 = vbcast.lane.b32.xlu0 %v199, %s204
        %v206 = vpop.permute.xlu0 %205
        %v207 = vlaneseq
        %v208 = vshrl.u32 %v207, 7
        %v209 = vsub.s32 4, %v208
        %v210 = vrot.slane %v155, %v209
        %212 = vbcast.lane.b32.xlu0 %v210, 256
        %v213 = vpop.permute.xlu0 %212
        %s215 = sor.u32 256, 8
        %216 = vbcast.lane.b32.xlu0 %v210, %s215
        %v217 = vpop.permute.xlu0 %216
        %v218 = vlaneseq
        %v219 = vshrl.u32 %v218, 7
        %v220 = vsub.s32 5, %v219
        %v221 = vrot.slane %v155, %v220
        %223 = vbcast.lane.b32.xlu0 %v221, 256
        %v224 = vpop.permute.xlu0 %223
        %s226 = sor.u32 256, 8
        %227 = vbcast.lane.b32.xlu0 %v221, %s226
        %v228 = vpop.permute.xlu0 %227
        %v229 = vlaneseq
        %v230 = vshrl.u32 %v229, 7
        %v231 = vsub.s32 6, %v230
        %v232 = vrot.slane %v155, %v231
        %234 = vbcast.lane.b32.xlu0 %v232, 256
        %v235 = vpop.permute.xlu0 %234
        %s237 = sor.u32 256, 8
        %238 = vbcast.lane.b32.xlu0 %v232, %s237
        %v239 = vpop.permute.xlu0 %238
        %v240 = vlaneseq
        %v241 = vshrl.u32 %v240, 7
        %v242 = vsub.s32 7, %v241
        %v243 = vrot.slane %v155, %v242
        %245 = vbcast.lane.b32.xlu0 %v243, 256
        %v246 = vpop.permute.xlu0 %245
        %s248 = sor.u32 256, 8
        %249 = vbcast.lane.b32.xlu0 %v243, %s248
        %v250 = vpop.permute.xlu0 %249
        %v251 = vlaneseq
        %v252 = vshrl.u32 %v251, 7
        %v253 = vsub.s32 0, %v252
        %v254 = vrot.slane %v156, %v253
        %256 = vbcast.lane.b32.xlu0 %v254, 256
        %v257 = vpop.permute.xlu0 %256
        %s259 = sor.u32 256, 8
        %260 = vbcast.lane.b32.xlu0 %v254, %s259
        %v261 = vpop.permute.xlu0 %260
        %v262 = vlaneseq
        %v263 = vshrl.u32 %v262, 7
        %v264 = vsub.s32 1, %v263
        %v265 = vrot.slane %v156, %v264
        %267 = vbcast.lane.b32.xlu0 %v265, 256
        %v268 = vpop.permute.xlu0 %267
        %s270 = sor.u32 256, 8
        %271 = vbcast.lane.b32.xlu0 %v265, %s270
        %v272 = vpop.permute.xlu0 %271
        %v273 = vlaneseq
        %v274 = vshrl.u32 %v273, 7
        %v275 = vsub.s32 2, %v274
        %v276 = vrot.slane %v156, %v275
        %278 = vbcast.lane.b32.xlu0 %v276, 256
        %v279 = vpop.permute.xlu0 %278
        %s281 = sor.u32 256, 8
        %282 = vbcast.lane.b32.xlu0 %v276, %s281
        %v283 = vpop.permute.xlu0 %282
        %v284 = vlaneseq
        %v285 = vshrl.u32 %v284, 7
        %v286 = vsub.s32 3, %v285
        %v287 = vrot.slane %v156, %v286
        %289 = vbcast.lane.b32.xlu0 %v287, 256
        %v290 = vpop.permute.xlu0 %289
        %s292 = sor.u32 256, 8
        %293 = vbcast.lane.b32.xlu0 %v287, %s292
        %v294 = vpop.permute.xlu0 %293
        %v295 = vlaneseq
        %v296 = vshrl.u32 %v295, 7
        %v297 = vsub.s32 4, %v296
        %v298 = vrot.slane %v156, %v297
        %300 = vbcast.lane.b32.xlu0 %v298, 256
        %v301 = vpop.permute.xlu0 %300
        %s303 = sor.u32 256, 8
        %304 = vbcast.lane.b32.xlu0 %v298, %s303
        %v305 = vpop.permute.xlu0 %304
        %v306 = vlaneseq
        %v307 = vshrl.u32 %v306, 7
        %v308 = vsub.s32 5, %v307
        %v309 = vrot.slane %v156, %v308
        %311 = vbcast.lane.b32.xlu0 %v309, 256
        %v312 = vpop.permute.xlu0 %311
        %s314 = sor.u32 256, 8
        %315 = vbcast.lane.b32.xlu0 %v309, %s314
        %v316 = vpop.permute.xlu0 %315
        %v317 = vlaneseq
        %v318 = vshrl.u32 %v317, 7
        %v319 = vsub.s32 6, %v318
        %v320 = vrot.slane %v156, %v319
        %322 = vbcast.lane.b32.xlu0 %v320, 256
        %v323 = vpop.permute.xlu0 %322
        %s325 = sor.u32 256, 8
        %326 = vbcast.lane.b32.xlu0 %v320, %s325
        %v327 = vpop.permute.xlu0 %326
        %v328 = vlaneseq
        %v329 = vshrl.u32 %v328, 7
        %v330 = vsub.s32 7, %v329
        %v331 = vrot.slane %v156, %v330
        %333 = vbcast.lane.b32.xlu0 %v331, 256
        %v334 = vpop.permute.xlu0 %333
        %s336 = sor.u32 256, 8
        %337 = vbcast.lane.b32.xlu0 %v331, %s336
        %v338 = vpop.permute.xlu0 %337
        %v339 = vlaneseq
        %v340 = vshrl.u32 %v339, 7
        %v341 = vsub.s32 0, %v340
        %v342 = vrot.slane %v157, %v341
        %344 = vbcast.lane.b32.xlu0 %v342, 256
        %v345 = vpop.permute.xlu0 %344
        %s347 = sor.u32 256, 8
        %348 = vbcast.lane.b32.xlu0 %v342, %s347
        %v349 = vpop.permute.xlu0 %348
        %v350 = vlaneseq
        %v351 = vshrl.u32 %v350, 7
        %v352 = vsub.s32 1, %v351
        %v353 = vrot.slane %v157, %v352
        %355 = vbcast.lane.b32.xlu0 %v353, 256
        %v356 = vpop.permute.xlu0 %355
        %s358 = sor.u32 256, 8
        %359 = vbcast.lane.b32.xlu0 %v353, %s358
        %v360 = vpop.permute.xlu0 %359
        %v361 = vlaneseq
        %v362 = vshrl.u32 %v361, 7
        %v363 = vsub.s32 2, %v362
        %v364 = vrot.slane %v157, %v363
        %366 = vbcast.lane.b32.xlu0 %v364, 256
        %v367 = vpop.permute.xlu0 %366
        %s369 = sor.u32 256, 8
        %370 = vbcast.lane.b32.xlu0 %v364, %s369
        %v371 = vpop.permute.xlu0 %370
        %v372 = vlaneseq
        %v373 = vshrl.u32 %v372, 7
        %v374 = vsub.s32 3, %v373
        %v375 = vrot.slane %v157, %v374
        %377 = vbcast.lane.b32.xlu0 %v375, 256
        %v378 = vpop.permute.xlu0 %377
        %s380 = sor.u32 256, 8
        %381 = vbcast.lane.b32.xlu0 %v375, %s380
        %v382 = vpop.permute.xlu0 %381
        %v383 = vlaneseq
        %v384 = vshrl.u32 %v383, 7
        %v385 = vsub.s32 4, %v384
        %v386 = vrot.slane %v157, %v385
        %388 = vbcast.lane.b32.xlu0 %v386, 256
        %v389 = vpop.permute.xlu0 %388
        %s391 = sor.u32 256, 8
        %392 = vbcast.lane.b32.xlu0 %v386, %s391
        %v393 = vpop.permute.xlu0 %392
        %v394 = vlaneseq
        %v395 = vshrl.u32 %v394, 7
        %v396 = vsub.s32 5, %v395
        %v397 = vrot.slane %v157, %v396
        %399 = vbcast.lane.b32.xlu0 %v397, 256
        %v400 = vpop.permute.xlu0 %399
        %s402 = sor.u32 256, 8
        %403 = vbcast.lane.b32.xlu0 %v397, %s402
        %v404 = vpop.permute.xlu0 %403
        %v405 = vlaneseq
        %v406 = vshrl.u32 %v405, 7
        %v407 = vsub.s32 6, %v406
        %v408 = vrot.slane %v157, %v407
        %410 = vbcast.lane.b32.xlu0 %v408, 256
        %v411 = vpop.permute.xlu0 %410
        %s413 = sor.u32 256, 8
        %414 = vbcast.lane.b32.xlu0 %v408, %s413
        %v415 = vpop.permute.xlu0 %414
        %v416 = vlaneseq
        %v417 = vshrl.u32 %v416, 7
        %v418 = vsub.s32 7, %v417
        %v419 = vrot.slane %v157, %v418
        %421 = vbcast.lane.b32.xlu0 %v419, 256
        %v422 = vpop.permute.xlu0 %421
        %s424 = sor.u32 256, 8
        %425 = vbcast.lane.b32.xlu0 %v419, %s424
        %v426 = vpop.permute.xlu0 %425
        %v427 = vlaneseq
        %v428 = vshrl.u32 %v427, 7
        %v429 = vsub.s32 0, %v428
        %v430 = vrot.slane %v158, %v429
        %432 = vbcast.lane.b32.xlu0 %v430, 256
        %v433 = vpop.permute.xlu0 %432
        %s435 = sor.u32 256, 8
        %436 = vbcast.lane.b32.xlu0 %v430, %s435
        %v437 = vpop.permute.xlu0 %436
        %v438 = vlaneseq
        %v439 = vshrl.u32 %v438, 7
        %v440 = vsub.s32 1, %v439
        %v441 = vrot.slane %v158, %v440
        %443 = vbcast.lane.b32.xlu0 %v441, 256
        %v444 = vpop.permute.xlu0 %443
        %s446 = sor.u32 256, 8
        %447 = vbcast.lane.b32.xlu0 %v441, %s446
        %v448 = vpop.permute.xlu0 %447
        %v449 = vlaneseq
        %v450 = vshrl.u32 %v449, 7
        %v451 = vsub.s32 2, %v450
        %v452 = vrot.slane %v158, %v451
        %454 = vbcast.lane.b32.xlu0 %v452, 256
        %v455 = vpop.permute.xlu0 %454
        %s457 = sor.u32 256, 8
        %458 = vbcast.lane.b32.xlu0 %v452, %s457
        %v459 = vpop.permute.xlu0 %458
        %v460 = vlaneseq
        %v461 = vshrl.u32 %v460, 7
        %v462 = vsub.s32 3, %v461
        %v463 = vrot.slane %v158, %v462
        %465 = vbcast.lane.b32.xlu0 %v463, 256
        %v466 = vpop.permute.xlu0 %465
        %s468 = sor.u32 256, 8
        %469 = vbcast.lane.b32.xlu0 %v463, %s468
        %v470 = vpop.permute.xlu0 %469
        %v471 = vlaneseq
        %v472 = vshrl.u32 %v471, 7
        %v473 = vsub.s32 4, %v472
        %v474 = vrot.slane %v158, %v473
        %476 = vbcast.lane.b32.xlu0 %v474, 256
        %v477 = vpop.permute.xlu0 %476
        %s479 = sor.u32 256, 8
        %480 = vbcast.lane.b32.xlu0 %v474, %s479
        %v481 = vpop.permute.xlu0 %480
        %v482 = vlaneseq
        %v483 = vshrl.u32 %v482, 7
        %v484 = vsub.s32 5, %v483
        %v485 = vrot.slane %v158, %v484
        %487 = vbcast.lane.b32.xlu0 %v485, 256
        %v488 = vpop.permute.xlu0 %487
        %s490 = sor.u32 256, 8
        %491 = vbcast.lane.b32.xlu0 %v485, %s490
        %v492 = vpop.permute.xlu0 %491
        %v493 = vlaneseq
        %v494 = vshrl.u32 %v493, 7
        %v495 = vsub.s32 6, %v494
        %v496 = vrot.slane %v158, %v495
        %498 = vbcast.lane.b32.xlu0 %v496, 256
        %v499 = vpop.permute.xlu0 %498
        %s501 = sor.u32 256, 8
        %502 = vbcast.lane.b32.xlu0 %v496, %s501
        %v503 = vpop.permute.xlu0 %502
        %v504 = vlaneseq
        %v505 = vshrl.u32 %v504, 7
        %v506 = vsub.s32 7, %v505
        %v507 = vrot.slane %v158, %v506
        %509 = vbcast.lane.b32.xlu0 %v507, 256
        %v510 = vpop.permute.xlu0 %509
        %s512 = sor.u32 256, 8
        %513 = vbcast.lane.b32.xlu0 %v507, %s512
        %v514 = vpop.permute.xlu0 %513
        %vm515 = vcmask 7168
        %v516 = vsel %vm515, %v169, %v345
        %v517 = vsel %vm515, %v173, %v349
        %v518 = vsel %vm515, %v180, %v356
        %v519 = vsel %vm515, %v184, %v360
        %v520 = vsel %vm515, %v191, %v367
        %v521 = vsel %vm515, %v195, %v371
        %v522 = vsel %vm515, %v202, %v378
        %v523 = vsel %vm515, %v206, %v382
        %v524 = vsel %vm515, %v213, %v389
        %v525 = vsel %vm515, %v217, %v393
        %v526 = vsel %vm515, %v224, %v400
        %v527 = vsel %vm515, %v228, %v404
        %v528 = vsel %vm515, %v235, %v411
        %v529 = vsel %vm515, %v239, %v415
        %v530 = vsel %vm515, %v246, %v422
        %v531 = vsel %vm515, %v250, %v426
        %v532 = vsel %vm515, %v257, %v433
        %v533 = vsel %vm515, %v261, %v437
        %v534 = vsel %vm515, %v268, %v444
        %v535 = vsel %vm515, %v272, %v448
        %v536 = vsel %vm515, %v279, %v455
        %v537 = vsel %vm515, %v283, %v459
        %v538 = vsel %vm515, %v290, %v466
        %v539 = vsel %vm515, %v294, %v470
        %v540 = vsel %vm515, %v301, %v477
        %v541 = vsel %vm515, %v305, %v481
        %v542 = vsel %vm515, %v312, %v488
        %v543 = vsel %vm515, %v316, %v492
        %v544 = vsel %vm515, %v323, %v499
        %v545 = vsel %vm515, %v327, %v503
        %v546 = vsel %vm515, %v334, %v510
        %v547 = vsel %vm515, %v338, %v514
        %v548 = vcombine.low %v516, %v520
        %v549 = vcombine.high %v516, %v520
        %v551 = vunpack.c.l.s4 1983009808
        %v552 = vunpack.c.0.s8 %v551
        %v553 = vlaneseq
        %v554 = vshrl.u32 %v553, 7
        %v555 = vsub.s32 %v552, %v554
        %v556 = vrot.slane %v548, %v555
        %v558 = vunpack.c.l.s4 1983009808
        %v559 = vunpack.c.0.s8 %v558
        %v560 = vlaneseq
        %v561 = vshrl.u32 %v560, 7
        %v562 = vsub.s32 %v559, %v561
        %v563 = vrot.slane %v549, %v562
        %v564 = vcombine.low %v518, %v522
        %v565 = vcombine.high %v518, %v522
        %v567 = vunpack.c.l.s4 1983009808
        %v568 = vunpack.c.0.s8 %v567
        %v569 = vlaneseq
        %v570 = vshrl.u32 %v569, 7
        %v571 = vsub.s32 %v568, %v570
        %v572 = vrot.slane %v564, %v571
        %v574 = vunpack.c.l.s4 1983009808
        %v575 = vunpack.c.0.s8 %v574
        %v576 = vlaneseq
        %v577 = vshrl.u32 %v576, 7
        %v578 = vsub.s32 %v575, %v577
        %v579 = vrot.slane %v565, %v578
        %v580 = vcombine.low %v524, %v528
        %v581 = vcombine.high %v524, %v528
        %v583 = vunpack.c.l.s4 1983009808
        %v584 = vunpack.c.0.s8 %v583
        %v585 = vlaneseq
        %v586 = vshrl.u32 %v585, 7
        %v587 = vsub.s32 %v584, %v586
        %v588 = vrot.slane %v580, %v587
        %v590 = vunpack.c.l.s4 1983009808
        %v591 = vunpack.c.0.s8 %v590
        %v592 = vlaneseq
        %v593 = vshrl.u32 %v592, 7
        %v594 = vsub.s32 %v591, %v593
        %v595 = vrot.slane %v581, %v594
        %v596 = vcombine.low %v526, %v530
        %v597 = vcombine.high %v526, %v530
        %v599 = vunpack.c.l.s4 1983009808
        %v600 = vunpack.c.0.s8 %v599
        %v601 = vlaneseq
        %v602 = vshrl.u32 %v601, 7
        %v603 = vsub.s32 %v600, %v602
        %v604 = vrot.slane %v596, %v603
        %v606 = vunpack.c.l.s4 1983009808
        %v607 = vunpack.c.0.s8 %v606
        %v608 = vlaneseq
        %v609 = vshrl.u32 %v608, 7
        %v610 = vsub.s32 %v607, %v609
        %v611 = vrot.slane %v597, %v610
        %v612 = vcombine.low %v556, %v572
        %v613 = vcombine.high %v556, %v572
        %v615 = vunpack.c.l.s4 1934713408
        %v616 = vunpack.c.0.s8 %v615
        %v617 = vlaneseq
        %v618 = vshrl.u32 %v617, 7
        %v619 = vsub.s32 %v616, %v618
        %v620 = vrot.slane %v612, %v619
        %v622 = vunpack.c.l.s4 1934713408
        %v623 = vunpack.c.0.s8 %v622
        %v624 = vlaneseq
        %v625 = vshrl.u32 %v624, 7
        %v626 = vsub.s32 %v623, %v625
        %v627 = vrot.slane %v613, %v626
        %v628 = vcombine.low %v563, %v579
        %v629 = vcombine.high %v563, %v579
        %v631 = vunpack.c.l.s4 1934713408
        %v632 = vunpack.c.0.s8 %v631
        %v633 = vlaneseq
        %v634 = vshrl.u32 %v633, 7
        %v635 = vsub.s32 %v632, %v634
        %v636 = vrot.slane %v628, %v635
        %v638 = vunpack.c.l.s4 1934713408
        %v639 = vunpack.c.0.s8 %v638
        %v640 = vlaneseq
        %v641 = vshrl.u32 %v640, 7
        %v642 = vsub.s32 %v639, %v641
        %v643 = vrot.slane %v629, %v642
        %v644 = vcombine.low %v588, %v604
        %v645 = vcombine.high %v588, %v604
        %v647 = vunpack.c.l.s4 1934713408
        %v648 = vunpack.c.0.s8 %v647
        %v649 = vlaneseq
        %v650 = vshrl.u32 %v649, 7
        %v651 = vsub.s32 %v648, %v650
        %v652 = vrot.slane %v644, %v651
        %v654 = vunpack.c.l.s4 1934713408
        %v655 = vunpack.c.0.s8 %v654
        %v656 = vlaneseq
        %v657 = vshrl.u32 %v656, 7
        %v658 = vsub.s32 %v655, %v657
        %v659 = vrot.slane %v645, %v658
        %v660 = vcombine.low %v595, %v611
        %v661 = vcombine.high %v595, %v611
        %v663 = vunpack.c.l.s4 1934713408
        %v664 = vunpack.c.0.s8 %v663
        %v665 = vlaneseq
        %v666 = vshrl.u32 %v665, 7
        %v667 = vsub.s32 %v664, %v666
        %v668 = vrot.slane %v660, %v667
        %v670 = vunpack.c.l.s4 1934713408
        %v671 = vunpack.c.0.s8 %v670
        %v672 = vlaneseq
        %v673 = vshrl.u32 %v672, 7
        %v674 = vsub.s32 %v671, %v673
        %v675 = vrot.slane %v661, %v674
        %v676 = vcombine.low %v620, %v652
        %v677 = vcombine.high %v620, %v652
        %v678 = vcombine.low %v627, %v659
        %v679 = vcombine.high %v627, %v659
        %v680 = vcombine.low %v636, %v668
        %v681 = vcombine.high %v636, %v668
        %v682 = vcombine.low %v643, %v675
        %v683 = vcombine.high %v643, %v675
        %v684 = vcombine.low %v532, %v536
        %v685 = vcombine.high %v532, %v536
        %v687 = vunpack.c.l.s4 1983009808
        %v688 = vunpack.c.0.s8 %v687
        %v689 = vlaneseq
        %v690 = vshrl.u32 %v689, 7
        %v691 = vsub.s32 %v688, %v690
        %v692 = vrot.slane %v684, %v691
        %v694 = vunpack.c.l.s4 1983009808
        %v695 = vunpack.c.0.s8 %v694
        %v696 = vlaneseq
        %v697 = vshrl.u32 %v696, 7
        %v698 = vsub.s32 %v695, %v697
        %v699 = vrot.slane %v685, %v698
        %v700 = vcombine.low %v534, %v538
        %v701 = vcombine.high %v534, %v538
        %v703 = vunpack.c.l.s4 1983009808
        %v704 = vunpack.c.0.s8 %v703
        %v705 = vlaneseq
        %v706 = vshrl.u32 %v705, 7
        %v707 = vsub.s32 %v704, %v706
        %v708 = vrot.slane %v700, %v707
        %v710 = vunpack.c.l.s4 1983009808
        %v711 = vunpack.c.0.s8 %v710
        %v712 = vlaneseq
        %v713 = vshrl.u32 %v712, 7
        %v714 = vsub.s32 %v711, %v713
        %v715 = vrot.slane %v701, %v714
        %v716 = vcombine.low %v540, %v544
        %v717 = vcombine.high %v540, %v544
        %v719 = vunpack.c.l.s4 1983009808
        %v720 = vunpack.c.0.s8 %v719
        %v721 = vlaneseq
        %v722 = vshrl.u32 %v721, 7
        %v723 = vsub.s32 %v720, %v722
        %v724 = vrot.slane %v716, %v723
        %v726 = vunpack.c.l.s4 1983009808
        %v727 = vunpack.c.0.s8 %v726
        %v728 = vlaneseq
        %v729 = vshrl.u32 %v728, 7
        %v730 = vsub.s32 %v727, %v729
        %v731 = vrot.slane %v717, %v730
        %v732 = vcombine.low %v542, %v546
        %v733 = vcombine.high %v542, %v546
        %v735 = vunpack.c.l.s4 1983009808
        %v736 = vunpack.c.0.s8 %v735
        %v737 = vlaneseq
        %v738 = vshrl.u32 %v737, 7
        %v739 = vsub.s32 %v736, %v738
        %v740 = vrot.slane %v732, %v739
        %v742 = vunpack.c.l.s4 1983009808
        %v743 = vunpack.c.0.s8 %v742
        %v744 = vlaneseq
        %v745 = vshrl.u32 %v744, 7
        %v746 = vsub.s32 %v743, %v745
        %v747 = vrot.slane %v733, %v746
        %v748 = vcombine.low %v692, %v708
        %v749 = vcombine.high %v692, %v708
        %v751 = vunpack.c.l.s4 1934713408
        %v752 = vunpack.c.0.s8 %v751
        %v753 = vlaneseq
        %v754 = vshrl.u32 %v753, 7
        %v755 = vsub.s32 %v752, %v754
        %v756 = vrot.slane %v748, %v755
        %v758 = vunpack.c.l.s4 1934713408
        %v759 = vunpack.c.0.s8 %v758
        %v760 = vlaneseq
        %v761 = vshrl.u32 %v760, 7
        %v762 = vsub.s32 %v759, %v761
        %v763 = vrot.slane %v749, %v762
        %v764 = vcombine.low %v699, %v715
        %v765 = vcombine.high %v699, %v715
        %v767 = vunpack.c.l.s4 1934713408
        %v768 = vunpack.c.0.s8 %v767
        %v769 = vlaneseq
        %v770 = vshrl.u32 %v769, 7
        %v771 = vsub.s32 %v768, %v770
        %v772 = vrot.slane %v764, %v771
        %v774 = vunpack.c.l.s4 1934713408
        %v775 = vunpack.c.0.s8 %v774
        %v776 = vlaneseq
        %v777 = vshrl.u32 %v776, 7
        %v778 = vsub.s32 %v775, %v777
        %v779 = vrot.slane %v765, %v778
        %v780 = vcombine.low %v724, %v740
        %v781 = vcombine.high %v724, %v740
        %v783 = vunpack.c.l.s4 1934713408
        %v784 = vunpack.c.0.s8 %v783
        %v785 = vlaneseq
        %v786 = vshrl.u32 %v785, 7
        %v787 = vsub.s32 %v784, %v786
        %v788 = vrot.slane %v780, %v787
        %v790 = vunpack.c.l.s4 1934713408
        %v791 = vunpack.c.0.s8 %v790
        %v792 = vlaneseq
        %v793 = vshrl.u32 %v792, 7
        %v794 = vsub.s32 %v791, %v793
        %v795 = vrot.slane %v781, %v794
        %v796 = vcombine.low %v731, %v747
        %v797 = vcombine.high %v731, %v747
        %v799 = vunpack.c.l.s4 1934713408
        %v800 = vunpack.c.0.s8 %v799
        %v801 = vlaneseq
        %v802 = vshrl.u32 %v801, 7
        %v803 = vsub.s32 %v800, %v802
        %v804 = vrot.slane %v796, %v803
        %v806 = vunpack.c.l.s4 1934713408
        %v807 = vunpack.c.0.s8 %v806
        %v808 = vlaneseq
        %v809 = vshrl.u32 %v808, 7
        %v810 = vsub.s32 %v807, %v809
        %v811 = vrot.slane %v797, %v810
        %v812 = vcombine.low %v756, %v788
        %v813 = vcombine.high %v756, %v788
        %v814 = vcombine.low %v763, %v795
        %v815 = vcombine.high %v763, %v795
        %v816 = vcombine.low %v772, %v804
        %v817 = vcombine.high %v772, %v804
        %v818 = vcombine.low %v779, %v811
        %v819 = vcombine.high %v779, %v811
        %v820 = vcombine.low %v517, %v521
        %v821 = vcombine.high %v517, %v521
        %v823 = vunpack.c.l.s4 1983009808
        %v824 = vunpack.c.0.s8 %v823
        %v825 = vlaneseq
        %v826 = vshrl.u32 %v825, 7
        %v827 = vsub.s32 %v824, %v826
        %v828 = vrot.slane %v820, %v827
        %v830 = vunpack.c.l.s4 1983009808
        %v831 = vunpack.c.0.s8 %v830
        %v832 = vlaneseq
        %v833 = vshrl.u32 %v832, 7
        %v834 = vsub.s32 %v831, %v833
        %v835 = vrot.slane %v821, %v834
        %v836 = vcombine.low %v519, %v523
        %v837 = vcombine.high %v519, %v523
        %v839 = vunpack.c.l.s4 1983009808
        %v840 = vunpack.c.0.s8 %v839
        %v841 = vlaneseq
        %v842 = vshrl.u32 %v841, 7
        %v843 = vsub.s32 %v840, %v842
        %v844 = vrot.slane %v836, %v843
        %v846 = vunpack.c.l.s4 1983009808
        %v847 = vunpack.c.0.s8 %v846
        %v848 = vlaneseq
        %v849 = vshrl.u32 %v848, 7
        %v850 = vsub.s32 %v847, %v849
        %v851 = vrot.slane %v837, %v850
        %v852 = vcombine.low %v525, %v529
        %v853 = vcombine.high %v525, %v529
        %v855 = vunpack.c.l.s4 1983009808
        %v856 = vunpack.c.0.s8 %v855
        %v857 = vlaneseq
        %v858 = vshrl.u32 %v857, 7
        %v859 = vsub.s32 %v856, %v858
        %v860 = vrot.slane %v852, %v859
        %v862 = vunpack.c.l.s4 1983009808
        %v863 = vunpack.c.0.s8 %v862
        %v864 = vlaneseq
        %v865 = vshrl.u32 %v864, 7
        %v866 = vsub.s32 %v863, %v865
        %v867 = vrot.slane %v853, %v866
        %v868 = vcombine.low %v527, %v531
        %v869 = vcombine.high %v527, %v531
        %v871 = vunpack.c.l.s4 1983009808
        %v872 = vunpack.c.0.s8 %v871
        %v873 = vlaneseq
        %v874 = vshrl.u32 %v873, 7
        %v875 = vsub.s32 %v872, %v874
        %v876 = vrot.slane %v868, %v875
        %v878 = vunpack.c.l.s4 1983009808
        %v879 = vunpack.c.0.s8 %v878
        %v880 = vlaneseq
        %v881 = vshrl.u32 %v880, 7
        %v882 = vsub.s32 %v879, %v881
        %v883 = vrot.slane %v869, %v882
        %v884 = vcombine.low %v828, %v844
        %v885 = vcombine.high %v828, %v844
        %v887 = vunpack.c.l.s4 1934713408
        %v888 = vunpack.c.0.s8 %v887
        %v889 = vlaneseq
        %v890 = vshrl.u32 %v889, 7
        %v891 = vsub.s32 %v888, %v890
        %v892 = vrot.slane %v884, %v891
        %v894 = vunpack.c.l.s4 1934713408
        %v895 = vunpack.c.0.s8 %v894
        %v896 = vlaneseq
        %v897 = vshrl.u32 %v896, 7
        %v898 = vsub.s32 %v895, %v897
        %v899 = vrot.slane %v885, %v898
        %v900 = vcombine.low %v835, %v851
        %v901 = vcombine.high %v835, %v851
        %v903 = vunpack.c.l.s4 1934713408
        %v904 = vunpack.c.0.s8 %v903
        %v905 = vlaneseq
        %v906 = vshrl.u32 %v905, 7
        %v907 = vsub.s32 %v904, %v906
        %v908 = vrot.slane %v900, %v907
        %v910 = vunpack.c.l.s4 1934713408
        %v911 = vunpack.c.0.s8 %v910
        %v912 = vlaneseq
        %v913 = vshrl.u32 %v912, 7
        %v914 = vsub.s32 %v911, %v913
        %v915 = vrot.slane %v901, %v914
        %v916 = vcombine.low %v860, %v876
        %v917 = vcombine.high %v860, %v876
        %v919 = vunpack.c.l.s4 1934713408
        %v920 = vunpack.c.0.s8 %v919
        %v921 = vlaneseq
        %v922 = vshrl.u32 %v921, 7
        %v923 = vsub.s32 %v920, %v922
        %v924 = vrot.slane %v916, %v923
        %v926 = vunpack.c.l.s4 1934713408
        %v927 = vunpack.c.0.s8 %v926
        %v928 = vlaneseq
        %v929 = vshrl.u32 %v928, 7
        %v930 = vsub.s32 %v927, %v929
        %v931 = vrot.slane %v917, %v930
        %v932 = vcombine.low %v867, %v883
        %v933 = vcombine.high %v867, %v883
        %v935 = vunpack.c.l.s4 1934713408
        %v936 = vunpack.c.0.s8 %v935
        %v937 = vlaneseq
        %v938 = vshrl.u32 %v937, 7
        %v939 = vsub.s32 %v936, %v938
        %v940 = vrot.slane %v932, %v939
        %v942 = vunpack.c.l.s4 1934713408
        %v943 = vunpack.c.0.s8 %v942
        %v944 = vlaneseq
        %v945 = vshrl.u32 %v944, 7
        %v946 = vsub.s32 %v943, %v945
        %v947 = vrot.slane %v933, %v946
        %v948 = vcombine.low %v892, %v924
        %v949 = vcombine.high %v892, %v924
        %v950 = vcombine.low %v899, %v931
        %v951 = vcombine.high %v899, %v931
        %v952 = vcombine.low %v908, %v940
        %v953 = vcombine.high %v908, %v940
        %v954 = vcombine.low %v915, %v947
        %v955 = vcombine.high %v915, %v947
        %v956 = vcombine.low %v533, %v537
        %v957 = vcombine.high %v533, %v537
        %v959 = vunpack.c.l.s4 1983009808
        %v960 = vunpack.c.0.s8 %v959
        %v961 = vlaneseq
        %v962 = vshrl.u32 %v961, 7
        %v963 = vsub.s32 %v960, %v962
        %v964 = vrot.slane %v956, %v963
        %v966 = vunpack.c.l.s4 1983009808
        %v967 = vunpack.c.0.s8 %v966
        %v968 = vlaneseq
        %v969 = vshrl.u32 %v968, 7
        %v970 = vsub.s32 %v967, %v969
        %v971 = vrot.slane %v957, %v970
        %v972 = vcombine.low %v535, %v539
        %v973 = vcombine.high %v535, %v539
        %v975 = vunpack.c.l.s4 1983009808
        %v976 = vunpack.c.0.s8 %v975
        %v977 = vlaneseq
        %v978 = vshrl.u32 %v977, 7
        %v979 = vsub.s32 %v976, %v978
        %v980 = vrot.slane %v972, %v979
        %v982 = vunpack.c.l.s4 1983009808
        %v983 = vunpack.c.0.s8 %v982
        %v984 = vlaneseq
        %v985 = vshrl.u32 %v984, 7
        %v986 = vsub.s32 %v983, %v985
        %v987 = vrot.slane %v973, %v986
        %v988 = vcombine.low %v541, %v545
        %v989 = vcombine.high %v541, %v545
        %v991 = vunpack.c.l.s4 1983009808
        %v992 = vunpack.c.0.s8 %v991
        %v993 = vlaneseq
        %v994 = vshrl.u32 %v993, 7
        %v995 = vsub.s32 %v992, %v994
        %v996 = vrot.slane %v988, %v995
        %v998 = vunpack.c.l.s4 1983009808
        %v999 = vunpack.c.0.s8 %v998
        %v1000 = vlaneseq
        %v1001 = vshrl.u32 %v1000, 7
        %v1002 = vsub.s32 %v999, %v1001
        %v1003 = vrot.slane %v989, %v1002
        %v1004 = vcombine.low %v543, %v547
        %v1005 = vcombine.high %v543, %v547
        %v1007 = vunpack.c.l.s4 1983009808
        %v1008 = vunpack.c.0.s8 %v1007
        %v1009 = vlaneseq
        %v1010 = vshrl.u32 %v1009, 7
        %v1011 = vsub.s32 %v1008, %v1010
        %v1012 = vrot.slane %v1004, %v1011
        %v1014 = vunpack.c.l.s4 1983009808
        %v1015 = vunpack.c.0.s8 %v1014
        %v1016 = vlaneseq
        %v1017 = vshrl.u32 %v1016, 7
        %v1018 = vsub.s32 %v1015, %v1017
        %v1019 = vrot.slane %v1005, %v1018
        %v1020 = vcombine.low %v964, %v980
        %v1021 = vcombine.high %v964, %v980
        %v1023 = vunpack.c.l.s4 1934713408
        %v1024 = vunpack.c.0.s8 %v1023
        %v1025 = vlaneseq
        %v1026 = vshrl.u32 %v1025, 7
        %v1027 = vsub.s32 %v1024, %v1026
        %v1028 = vrot.slane %v1020, %v1027
        %v1030 = vunpack.c.l.s4 1934713408
        %v1031 = vunpack.c.0.s8 %v1030
        %v1032 = vlaneseq
        %v1033 = vshrl.u32 %v1032, 7
        %v1034 = vsub.s32 %v1031, %v1033
        %v1035 = vrot.slane %v1021, %v1034
        %v1036 = vcombine.low %v971, %v987
        %v1037 = vcombine.high %v971, %v987
        %v1039 = vunpack.c.l.s4 1934713408
        %v1040 = vunpack.c.0.s8 %v1039
        %v1041 = vlaneseq
        %v1042 = vshrl.u32 %v1041, 7
        %v1043 = vsub.s32 %v1040, %v1042
        %v1044 = vrot.slane %v1036, %v1043
        %v1046 = vunpack.c.l.s4 1934713408
        %v1047 = vunpack.c.0.s8 %v1046
        %v1048 = vlaneseq
        %v1049 = vshrl.u32 %v1048, 7
        %v1050 = vsub.s32 %v1047, %v1049
        %v1051 = vrot.slane %v1037, %v1050
        %v1052 = vcombine.low %v996, %v1012
        %v1053 = vcombine.high %v996, %v1012
        %v1055 = vunpack.c.l.s4 1934713408
        %v1056 = vunpack.c.0.s8 %v1055
        %v1057 = vlaneseq
        %v1058 = vshrl.u32 %v1057, 7
        %v1059 = vsub.s32 %v1056, %v1058
        %v1060 = vrot.slane %v1052, %v1059
        %v1062 = vunpack.c.l.s4 1934713408
        %v1063 = vunpack.c.0.s8 %v1062
        %v1064 = vlaneseq
        %v1065 = vshrl.u32 %v1064, 7
        %v1066 = vsub.s32 %v1063, %v1065
        %v1067 = vrot.slane %v1053, %v1066
        %v1068 = vcombine.low %v1003, %v1019
        %v1069 = vcombine.high %v1003, %v1019
        %v1071 = vunpack.c.l.s4 1934713408
        %v1072 = vunpack.c.0.s8 %v1071
        %v1073 = vlaneseq
        %v1074 = vshrl.u32 %v1073, 7
        %v1075 = vsub.s32 %v1072, %v1074
        %v1076 = vrot.slane %v1068, %v1075
        %v1078 = vunpack.c.l.s4 1934713408
        %v1079 = vunpack.c.0.s8 %v1078
        %v1080 = vlaneseq
        %v1081 = vshrl.u32 %v1080, 7
        %v1082 = vsub.s32 %v1079, %v1081
        %v1083 = vrot.slane %v1069, %v1082
        %v1084 = vcombine.low %v1028, %v1060
        %v1085 = vcombine.high %v1028, %v1060
        %v1086 = vcombine.low %v1035, %v1067
        %v1087 = vcombine.high %v1035, %v1067
        %v1088 = vcombine.low %v1044, %v1076
        %v1089 = vcombine.high %v1044, %v1076
        %v1090 = vcombine.low %v1051, %v1083
        %v1091 = vcombine.high %v1051, %v1083
        %1094 = vrot.lane.b32.xlu0 %v677, 2
        %v1095 = vpop.permute.xlu0 %1094
        %1096 = vrot.lane.b32.xlu0 %v813, 2
        %v1097 = vpop.permute.xlu0 %1096
        %1102 = vrot.lane.b32.xlu0 %v678, 4
        %v1103 = vpop.permute.xlu0 %1102
        %1104 = vrot.lane.b32.xlu0 %v814, 4
        %v1105 = vpop.permute.xlu0 %1104
        %1110 = vrot.lane.b32.xlu0 %v679, 6
        %v1111 = vpop.permute.xlu0 %1110
        %1112 = vrot.lane.b32.xlu0 %v815, 6
        %v1113 = vpop.permute.xlu0 %1112
        %1118 = vrot.lane.b32.xlu0 %v680, 8
        %v1119 = vpop.permute.xlu0 %1118
        %1120 = vrot.lane.b32.xlu0 %v816, 8
        %v1121 = vpop.permute.xlu0 %1120
        %1126 = vrot.lane.b32.xlu0 %v681, 10
        %v1127 = vpop.permute.xlu0 %1126
        %1128 = vrot.lane.b32.xlu0 %v817, 10
        %v1129 = vpop.permute.xlu0 %1128
        %1134 = vrot.lane.b32.xlu0 %v682, 12
        %v1135 = vpop.permute.xlu0 %1134
        %1136 = vrot.lane.b32.xlu0 %v818, 12
        %v1137 = vpop.permute.xlu0 %1136
        %1142 = vrot.lane.b32.xlu0 %v683, 14
        %v1143 = vpop.permute.xlu0 %1142
        %1144 = vrot.lane.b32.xlu0 %v819, 14
        %v1145 = vpop.permute.xlu0 %1144
        %1150 = vrot.lane.b32.xlu0 %v948, 16
        %v1151 = vpop.permute.xlu0 %1150
        %1152 = vrot.lane.b32.xlu0 %v1084, 16
        %v1153 = vpop.permute.xlu0 %1152
        %1158 = vrot.lane.b32.xlu0 %v949, 18
        %v1159 = vpop.permute.xlu0 %1158
        %1160 = vrot.lane.b32.xlu0 %v1085, 18
        %v1161 = vpop.permute.xlu0 %1160
        %1166 = vrot.lane.b32.xlu0 %v950, 20
        %v1167 = vpop.permute.xlu0 %1166
        %1168 = vrot.lane.b32.xlu0 %v1086, 20
        %v1169 = vpop.permute.xlu0 %1168
        %1174 = vrot.lane.b32.xlu0 %v951, 22
        %v1175 = vpop.permute.xlu0 %1174
        %1176 = vrot.lane.b32.xlu0 %v1087, 22
        %v1177 = vpop.permute.xlu0 %1176
        %1182 = vrot.lane.b32.xlu0 %v952, 24
        %v1183 = vpop.permute.xlu0 %1182
        %1184 = vrot.lane.b32.xlu0 %v1088, 24
        %v1185 = vpop.permute.xlu0 %1184
        %1190 = vrot.lane.b32.xlu0 %v953, 26
        %v1191 = vpop.permute.xlu0 %1190
        %1192 = vrot.lane.b32.xlu0 %v1089, 26
        %v1193 = vpop.permute.xlu0 %1192
        %1198 = vrot.lane.b32.xlu0 %v954, 28
        %v1199 = vpop.permute.xlu0 %1198
        %1200 = vrot.lane.b32.xlu0 %v1090, 28
        %v1201 = vpop.permute.xlu0 %1200
        %1206 = vrot.lane.b32.xlu0 %v955, 30
        %v1207 = vpop.permute.xlu0 %1206
        %1208 = vrot.lane.b32.xlu0 %v1091, 30
        %v1209 = vpop.permute.xlu0 %1208
        %vm1212 = vcmask 15360
        %v1213 = vsel %vm1212, %v676, %v1095
        %v1214 = vsel %vm1212, %v812, %v1097
        %vm1215 = vcmask 31744
        %v1216 = vsel %vm1215, %v1213, %v1103
        %v1217 = vsel %vm1215, %v1214, %v1105
        %vm1218 = vcmask 48128
        %v1219 = vsel %vm1218, %v1216, %v1111
        %v1220 = vsel %vm1218, %v1217, %v1113
        %vm1221 = vcmask 64512
        %v1222 = vsel %vm1221, %v1219, %v1119
        %v1223 = vsel %vm1221, %v1220, %v1121
        %vm1224 = vcmask 80896
        %v1225 = vsel %vm1224, %v1222, %v1127
        %v1226 = vsel %vm1224, %v1223, %v1129
        %vm1227 = vcmask 97280
        %v1228 = vsel %vm1227, %v1225, %v1135
        %v1229 = vsel %vm1227, %v1226, %v1137
        %vm1230 = vcmask 113664
        %v1231 = vsel %vm1230, %v1228, %v1143
        %v1232 = vsel %vm1230, %v1229, %v1145
        %vm1233 = vcmask 130048
        %v1234 = vsel %vm1233, %v1231, %v1151
        %v1235 = vsel %vm1233, %v1232, %v1153
        %vm1236 = vcmask 146432
        %v1237 = vsel %vm1236, %v1234, %v1159
        %v1238 = vsel %vm1236, %v1235, %v1161
        %vm1239 = vcmask 162816
        %v1240 = vsel %vm1239, %v1237, %v1167
        %v1241 = vsel %vm1239, %v1238, %v1169
        %vm1242 = vcmask 179200
        %v1243 = vsel %vm1242, %v1240, %v1175
        %v1244 = vsel %vm1242, %v1241, %v1177
        %vm1245 = vcmask 195584
        %v1246 = vsel %vm1245, %v1243, %v1183
        %v1247 = vsel %vm1245, %v1244, %v1185
        %vm1248 = vcmask 211968
        %v1249 = vsel %vm1248, %v1246, %v1191
        %v1250 = vsel %vm1248, %v1247, %v1193
        %vm1251 = vcmask 228352
        %v1252 = vsel %vm1251, %v1249, %v1199
        %v1253 = vsel %vm1251, %v1250, %v1201
        %vm1254 = vcmask 244736
        %v1255 = vsel %vm1254, %v1252, %v1207
        %v1256 = vsel %vm1254, %v1253, %v1209
        %v1257 = vlaneseq
        %v1258 = vshrl.u32 %v1257, 7
        %v1259 = vsub.s32 0, %v1258
        %v1260 = vrot.slane %v159, %v1259
        %1262 = vbcast.lane.b32.xlu0 %v1260, 256
        %v1263 = vpop.permute.xlu0 %1262
        %s1265 = sor.u32 256, 8
        %1266 = vbcast.lane.b32.xlu0 %v1260, %s1265
        %v1267 = vpop.permute.xlu0 %1266
        %v1268 = vlaneseq
        %v1269 = vshrl.u32 %v1268, 7
        %v1270 = vsub.s32 1, %v1269
        %v1271 = vrot.slane %v159, %v1270
        %1273 = vbcast.lane.b32.xlu0 %v1271, 256
        %v1274 = vpop.permute.xlu0 %1273
        %s1276 = sor.u32 256, 8
        %1277 = vbcast.lane.b32.xlu0 %v1271, %s1276
        %v1278 = vpop.permute.xlu0 %1277
        %v1279 = vlaneseq
        %v1280 = vshrl.u32 %v1279, 7
        %v1281 = vsub.s32 2, %v1280
        %v1282 = vrot.slane %v159, %v1281
        %1284 = vbcast.lane.b32.xlu0 %v1282, 256
        %v1285 = vpop.permute.xlu0 %1284
        %s1287 = sor.u32 256, 8
        %1288 = vbcast.lane.b32.xlu0 %v1282, %s1287
        %v1289 = vpop.permute.xlu0 %1288
        %v1290 = vlaneseq
        %v1291 = vshrl.u32 %v1290, 7
        %v1292 = vsub.s32 3, %v1291
        %v1293 = vrot.slane %v159, %v1292
        %1295 = vbcast.lane.b32.xlu0 %v1293, 256
        %v1296 = vpop.permute.xlu0 %1295
        %s1298 = sor.u32 256, 8
        %1299 = vbcast.lane.b32.xlu0 %v1293, %s1298
        %v1300 = vpop.permute.xlu0 %1299
        %v1301 = vlaneseq
        %v1302 = vshrl.u32 %v1301, 7
        %v1303 = vsub.s32 4, %v1302
        %v1304 = vrot.slane %v159, %v1303
        %1306 = vbcast.lane.b32.xlu0 %v1304, 256
        %v1307 = vpop.permute.xlu0 %1306
        %s1309 = sor.u32 256, 8
        %1310 = vbcast.lane.b32.xlu0 %v1304, %s1309
        %v1311 = vpop.permute.xlu0 %1310
        %v1312 = vlaneseq
        %v1313 = vshrl.u32 %v1312, 7
        %v1314 = vsub.s32 5, %v1313
        %v1315 = vrot.slane %v159, %v1314
        %1317 = vbcast.lane.b32.xlu0 %v1315, 256
        %v1318 = vpop.permute.xlu0 %1317
        %s1320 = sor.u32 256, 8
        %1321 = vbcast.lane.b32.xlu0 %v1315, %s1320
        %v1322 = vpop.permute.xlu0 %1321
        %v1323 = vlaneseq
        %v1324 = vshrl.u32 %v1323, 7
        %v1325 = vsub.s32 6, %v1324
        %v1326 = vrot.slane %v159, %v1325
        %1328 = vbcast.lane.b32.xlu0 %v1326, 256
        %v1329 = vpop.permute.xlu0 %1328
        %s1331 = sor.u32 256, 8
        %1332 = vbcast.lane.b32.xlu0 %v1326, %s1331
        %v1333 = vpop.permute.xlu0 %1332
        %v1334 = vlaneseq
        %v1335 = vshrl.u32 %v1334, 7
        %v1336 = vsub.s32 7, %v1335
        %v1337 = vrot.slane %v159, %v1336
        %1339 = vbcast.lane.b32.xlu0 %v1337, 256
        %v1340 = vpop.permute.xlu0 %1339
        %s1342 = sor.u32 256, 8
        %1343 = vbcast.lane.b32.xlu0 %v1337, %s1342
        %v1344 = vpop.permute.xlu0 %1343
        %v1345 = vlaneseq
        %v1346 = vshrl.u32 %v1345, 7
        %v1347 = vsub.s32 0, %v1346
        %v1348 = vrot.slane %v160, %v1347
        %1350 = vbcast.lane.b32.xlu0 %v1348, 256
        %v1351 = vpop.permute.xlu0 %1350
        %s1353 = sor.u32 256, 8
        %1354 = vbcast.lane.b32.xlu0 %v1348, %s1353
        %v1355 = vpop.permute.xlu0 %1354
        %v1356 = vlaneseq
        %v1357 = vshrl.u32 %v1356, 7
        %v1358 = vsub.s32 1, %v1357
        %v1359 = vrot.slane %v160, %v1358
        %1361 = vbcast.lane.b32.xlu0 %v1359, 256
        %v1362 = vpop.permute.xlu0 %1361
        %s1364 = sor.u32 256, 8
        %1365 = vbcast.lane.b32.xlu0 %v1359, %s1364
        %v1366 = vpop.permute.xlu0 %1365
        %v1367 = vlaneseq
        %v1368 = vshrl.u32 %v1367, 7
        %v1369 = vsub.s32 2, %v1368
        %v1370 = vrot.slane %v160, %v1369
        %1372 = vbcast.lane.b32.xlu0 %v1370, 256
        %v1373 = vpop.permute.xlu0 %1372
        %s1375 = sor.u32 256, 8
        %1376 = vbcast.lane.b32.xlu0 %v1370, %s1375
        %v1377 = vpop.permute.xlu0 %1376
        %v1378 = vlaneseq
        %v1379 = vshrl.u32 %v1378, 7
        %v1380 = vsub.s32 3, %v1379
        %v1381 = vrot.slane %v160, %v1380
        %1383 = vbcast.lane.b32.xlu0 %v1381, 256
        %v1384 = vpop.permute.xlu0 %1383
        %s1386 = sor.u32 256, 8
        %1387 = vbcast.lane.b32.xlu0 %v1381, %s1386
        %v1388 = vpop.permute.xlu0 %1387
        %v1389 = vlaneseq
        %v1390 = vshrl.u32 %v1389, 7
        %v1391 = vsub.s32 4, %v1390
        %v1392 = vrot.slane %v160, %v1391
        %1394 = vbcast.lane.b32.xlu0 %v1392, 256
        %v1395 = vpop.permute.xlu0 %1394
        %s1397 = sor.u32 256, 8
        %1398 = vbcast.lane.b32.xlu0 %v1392, %s1397
        %v1399 = vpop.permute.xlu0 %1398
        %v1400 = vlaneseq
        %v1401 = vshrl.u32 %v1400, 7
        %v1402 = vsub.s32 5, %v1401
        %v1403 = vrot.slane %v160, %v1402
        %1405 = vbcast.lane.b32.xlu0 %v1403, 256
        %v1406 = vpop.permute.xlu0 %1405
        %s1408 = sor.u32 256, 8
        %1409 = vbcast.lane.b32.xlu0 %v1403, %s1408
        %v1410 = vpop.permute.xlu0 %1409
        %v1411 = vlaneseq
        %v1412 = vshrl.u32 %v1411, 7
        %v1413 = vsub.s32 6, %v1412
        %v1414 = vrot.slane %v160, %v1413
        %1416 = vbcast.lane.b32.xlu0 %v1414, 256
        %v1417 = vpop.permute.xlu0 %1416
        %s1419 = sor.u32 256, 8
        %1420 = vbcast.lane.b32.xlu0 %v1414, %s1419
        %v1421 = vpop.permute.xlu0 %1420
        %v1422 = vlaneseq
        %v1423 = vshrl.u32 %v1422, 7
        %v1424 = vsub.s32 7, %v1423
        %v1425 = vrot.slane %v160, %v1424
        %1427 = vbcast.lane.b32.xlu0 %v1425, 256
        %v1428 = vpop.permute.xlu0 %1427
        %s1430 = sor.u32 256, 8
        %1431 = vbcast.lane.b32.xlu0 %v1425, %s1430
        %v1432 = vpop.permute.xlu0 %1431
        %v1433 = vlaneseq
        %v1434 = vshrl.u32 %v1433, 7
        %v1435 = vsub.s32 0, %v1434
        %v1436 = vrot.slane %v161, %v1435
        %1438 = vbcast.lane.b32.xlu0 %v1436, 256
        %v1439 = vpop.permute.xlu0 %1438
        %s1441 = sor.u32 256, 8
        %1442 = vbcast.lane.b32.xlu0 %v1436, %s1441
        %v1443 = vpop.permute.xlu0 %1442
        %v1444 = vlaneseq
        %v1445 = vshrl.u32 %v1444, 7
        %v1446 = vsub.s32 1, %v1445
        %v1447 = vrot.slane %v161, %v1446
        %1449 = vbcast.lane.b32.xlu0 %v1447, 256
        %v1450 = vpop.permute.xlu0 %1449
        %s1452 = sor.u32 256, 8
        %1453 = vbcast.lane.b32.xlu0 %v1447, %s1452
        %v1454 = vpop.permute.xlu0 %1453
        %v1455 = vlaneseq
        %v1456 = vshrl.u32 %v1455, 7
        %v1457 = vsub.s32 2, %v1456
        %v1458 = vrot.slane %v161, %v1457
        %1460 = vbcast.lane.b32.xlu0 %v1458, 256
        %v1461 = vpop.permute.xlu0 %1460
        %s1463 = sor.u32 256, 8
        %1464 = vbcast.lane.b32.xlu0 %v1458, %s1463
        %v1465 = vpop.permute.xlu0 %1464
        %v1466 = vlaneseq
        %v1467 = vshrl.u32 %v1466, 7
        %v1468 = vsub.s32 3, %v1467
        %v1469 = vrot.slane %v161, %v1468
        %1471 = vbcast.lane.b32.xlu0 %v1469, 256
        %v1472 = vpop.permute.xlu0 %1471
        %s1474 = sor.u32 256, 8
        %1475 = vbcast.lane.b32.xlu0 %v1469, %s1474
        %v1476 = vpop.permute.xlu0 %1475
        %v1477 = vlaneseq
        %v1478 = vshrl.u32 %v1477, 7
        %v1479 = vsub.s32 4, %v1478
        %v1480 = vrot.slane %v161, %v1479
        %1482 = vbcast.lane.b32.xlu0 %v1480, 256
        %v1483 = vpop.permute.xlu0 %1482
        %s1485 = sor.u32 256, 8
        %1486 = vbcast.lane.b32.xlu0 %v1480, %s1485
        %v1487 = vpop.permute.xlu0 %1486
        %v1488 = vlaneseq
        %v1489 = vshrl.u32 %v1488, 7
        %v1490 = vsub.s32 5, %v1489
        %v1491 = vrot.slane %v161, %v1490
        %1493 = vbcast.lane.b32.xlu0 %v1491, 256
        %v1494 = vpop.permute.xlu0 %1493
        %s1496 = sor.u32 256, 8
        %1497 = vbcast.lane.b32.xlu0 %v1491, %s1496
        %v1498 = vpop.permute.xlu0 %1497
        %v1499 = vlaneseq
        %v1500 = vshrl.u32 %v1499, 7
        %v1501 = vsub.s32 6, %v1500
        %v1502 = vrot.slane %v161, %v1501
        %1504 = vbcast.lane.b32.xlu0 %v1502, 256
        %v1505 = vpop.permute.xlu0 %1504
        %s1507 = sor.u32 256, 8
        %1508 = vbcast.lane.b32.xlu0 %v1502, %s1507
        %v1509 = vpop.permute.xlu0 %1508
        %v1510 = vlaneseq
        %v1511 = vshrl.u32 %v1510, 7
        %v1512 = vsub.s32 7, %v1511
        %v1513 = vrot.slane %v161, %v1512
        %1515 = vbcast.lane.b32.xlu0 %v1513, 256
        %v1516 = vpop.permute.xlu0 %1515
        %s1518 = sor.u32 256, 8
        %1519 = vbcast.lane.b32.xlu0 %v1513, %s1518
        %v1520 = vpop.permute.xlu0 %1519
        %v1521 = vlaneseq
        %v1522 = vshrl.u32 %v1521, 7
        %v1523 = vsub.s32 0, %v1522
        %v1524 = vrot.slane %v162, %v1523
        %1526 = vbcast.lane.b32.xlu0 %v1524, 256
        %v1527 = vpop.permute.xlu0 %1526
        %s1529 = sor.u32 256, 8
        %1530 = vbcast.lane.b32.xlu0 %v1524, %s1529
        %v1531 = vpop.permute.xlu0 %1530
        %v1532 = vlaneseq
        %v1533 = vshrl.u32 %v1532, 7
        %v1534 = vsub.s32 1, %v1533
        %v1535 = vrot.slane %v162, %v1534
        %1537 = vbcast.lane.b32.xlu0 %v1535, 256
        %v1538 = vpop.permute.xlu0 %1537
        %s1540 = sor.u32 256, 8
        %1541 = vbcast.lane.b32.xlu0 %v1535, %s1540
        %v1542 = vpop.permute.xlu0 %1541
        %v1543 = vlaneseq
        %v1544 = vshrl.u32 %v1543, 7
        %v1545 = vsub.s32 2, %v1544
        %v1546 = vrot.slane %v162, %v1545
        %1548 = vbcast.lane.b32.xlu0 %v1546, 256
        %v1549 = vpop.permute.xlu0 %1548
        %s1551 = sor.u32 256, 8
        %1552 = vbcast.lane.b32.xlu0 %v1546, %s1551
        %v1553 = vpop.permute.xlu0 %1552
        %v1554 = vlaneseq
        %v1555 = vshrl.u32 %v1554, 7
        %v1556 = vsub.s32 3, %v1555
        %v1557 = vrot.slane %v162, %v1556
        %1559 = vbcast.lane.b32.xlu0 %v1557, 256
        %v1560 = vpop.permute.xlu0 %1559
        %s1562 = sor.u32 256, 8
        %1563 = vbcast.lane.b32.xlu0 %v1557, %s1562
        %v1564 = vpop.permute.xlu0 %1563
        %v1565 = vlaneseq
        %v1566 = vshrl.u32 %v1565, 7
        %v1567 = vsub.s32 4, %v1566
        %v1568 = vrot.slane %v162, %v1567
        %1570 = vbcast.lane.b32.xlu0 %v1568, 256
        %v1571 = vpop.permute.xlu0 %1570
        %s1573 = sor.u32 256, 8
        %1574 = vbcast.lane.b32.xlu0 %v1568, %s1573
        %v1575 = vpop.permute.xlu0 %1574
        %v1576 = vlaneseq
        %v1577 = vshrl.u32 %v1576, 7
        %v1578 = vsub.s32 5, %v1577
        %v1579 = vrot.slane %v162, %v1578
        %1581 = vbcast.lane.b32.xlu0 %v1579, 256
        %v1582 = vpop.permute.xlu0 %1581
        %s1584 = sor.u32 256, 8
        %1585 = vbcast.lane.b32.xlu0 %v1579, %s1584
        %v1586 = vpop.permute.xlu0 %1585
        %v1587 = vlaneseq
        %v1588 = vshrl.u32 %v1587, 7
        %v1589 = vsub.s32 6, %v1588
        %v1590 = vrot.slane %v162, %v1589
        %1592 = vbcast.lane.b32.xlu0 %v1590, 256
        %v1593 = vpop.permute.xlu0 %1592
        %s1595 = sor.u32 256, 8
        %1596 = vbcast.lane.b32.xlu0 %v1590, %s1595
        %v1597 = vpop.permute.xlu0 %1596
        %v1598 = vlaneseq
        %v1599 = vshrl.u32 %v1598, 7
        %v1600 = vsub.s32 7, %v1599
        %v1601 = vrot.slane %v162, %v1600
        %1603 = vbcast.lane.b32.xlu0 %v1601, 256
        %v1604 = vpop.permute.xlu0 %1603
        %s1606 = sor.u32 256, 8
        %1607 = vbcast.lane.b32.xlu0 %v1601, %s1606
        %v1608 = vpop.permute.xlu0 %1607
        %v1609 = vsel %vm515, %v1263, %v1439
        %v1610 = vsel %vm515, %v1267, %v1443
        %v1611 = vsel %vm515, %v1274, %v1450
        %v1612 = vsel %vm515, %v1278, %v1454
        %v1613 = vsel %vm515, %v1285, %v1461
        %v1614 = vsel %vm515, %v1289, %v1465
        %v1615 = vsel %vm515, %v1296, %v1472
        %v1616 = vsel %vm515, %v1300, %v1476
        %v1617 = vsel %vm515, %v1307, %v1483
        %v1618 = vsel %vm515, %v1311, %v1487
        %v1619 = vsel %vm515, %v1318, %v1494
        %v1620 = vsel %vm515, %v1322, %v1498
        %v1621 = vsel %vm515, %v1329, %v1505
        %v1622 = vsel %vm515, %v1333, %v1509
        %v1623 = vsel %vm515, %v1340, %v1516
        %v1624 = vsel %vm515, %v1344, %v1520
        %v1625 = vsel %vm515, %v1351, %v1527
        %v1626 = vsel %vm515, %v1355, %v1531
        %v1627 = vsel %vm515, %v1362, %v1538
        %v1628 = vsel %vm515, %v1366, %v1542
        %v1629 = vsel %vm515, %v1373, %v1549
        %v1630 = vsel %vm515, %v1377, %v1553
        %v1631 = vsel %vm515, %v1384, %v1560
        %v1632 = vsel %vm515, %v1388, %v1564
        %v1633 = vsel %vm515, %v1395, %v1571
        %v1634 = vsel %vm515, %v1399, %v1575
        %v1635 = vsel %vm515, %v1406, %v1582
        %v1636 = vsel %vm515, %v1410, %v1586
        %v1637 = vsel %vm515, %v1417, %v1593
        %v1638 = vsel %vm515, %v1421, %v1597
        %v1639 = vsel %vm515, %v1428, %v1604
        %v1640 = vsel %vm515, %v1432, %v1608
        %v1641 = vcombine.low %v1609, %v1613
        %v1642 = vcombine.high %v1609, %v1613
        %v1644 = vunpack.c.l.s4 1983009808
        %v1645 = vunpack.c.0.s8 %v1644
        %v1646 = vlaneseq
        %v1647 = vshrl.u32 %v1646, 7
        %v1648 = vsub.s32 %v1645, %v1647
        %v1649 = vrot.slane %v1641, %v1648
        %v1651 = vunpack.c.l.s4 1983009808
        %v1652 = vunpack.c.0.s8 %v1651
        %v1653 = vlaneseq
        %v1654 = vshrl.u32 %v1653, 7
        %v1655 = vsub.s32 %v1652, %v1654
        %v1656 = vrot.slane %v1642, %v1655
        %v1657 = vcombine.low %v1611, %v1615
        %v1658 = vcombine.high %v1611, %v1615
        %v1660 = vunpack.c.l.s4 1983009808
        %v1661 = vunpack.c.0.s8 %v1660
        %v1662 = vlaneseq
        %v1663 = vshrl.u32 %v1662, 7
        %v1664 = vsub.s32 %v1661, %v1663
        %v1665 = vrot.slane %v1657, %v1664
        %v1667 = vunpack.c.l.s4 1983009808
        %v1668 = vunpack.c.0.s8 %v1667
        %v1669 = vlaneseq
        %v1670 = vshrl.u32 %v1669, 7
        %v1671 = vsub.s32 %v1668, %v1670
        %v1672 = vrot.slane %v1658, %v1671
        %v1673 = vcombine.low %v1617, %v1621
        %v1674 = vcombine.high %v1617, %v1621
        %v1676 = vunpack.c.l.s4 1983009808
        %v1677 = vunpack.c.0.s8 %v1676
        %v1678 = vlaneseq
        %v1679 = vshrl.u32 %v1678, 7
        %v1680 = vsub.s32 %v1677, %v1679
        %v1681 = vrot.slane %v1673, %v1680
        %v1683 = vunpack.c.l.s4 1983009808
        %v1684 = vunpack.c.0.s8 %v1683
        %v1685 = vlaneseq
        %v1686 = vshrl.u32 %v1685, 7
        %v1687 = vsub.s32 %v1684, %v1686
        %v1688 = vrot.slane %v1674, %v1687
        %v1689 = vcombine.low %v1619, %v1623
        %v1690 = vcombine.high %v1619, %v1623
        %v1692 = vunpack.c.l.s4 1983009808
        %v1693 = vunpack.c.0.s8 %v1692
        %v1694 = vlaneseq
        %v1695 = vshrl.u32 %v1694, 7
        %v1696 = vsub.s32 %v1693, %v1695
        %v1697 = vrot.slane %v1689, %v1696
        %v1699 = vunpack.c.l.s4 1983009808
        %v1700 = vunpack.c.0.s8 %v1699
        %v1701 = vlaneseq
        %v1702 = vshrl.u32 %v1701, 7
        %v1703 = vsub.s32 %v1700, %v1702
        %v1704 = vrot.slane %v1690, %v1703
        %v1705 = vcombine.low %v1649, %v1665
        %v1706 = vcombine.high %v1649, %v1665
        %v1708 = vunpack.c.l.s4 1934713408
        %v1709 = vunpack.c.0.s8 %v1708
        %v1710 = vlaneseq
        %v1711 = vshrl.u32 %v1710, 7
        %v1712 = vsub.s32 %v1709, %v1711
        %v1713 = vrot.slane %v1705, %v1712
        %v1715 = vunpack.c.l.s4 1934713408
        %v1716 = vunpack.c.0.s8 %v1715
        %v1717 = vlaneseq
        %v1718 = vshrl.u32 %v1717, 7
        %v1719 = vsub.s32 %v1716, %v1718
        %v1720 = vrot.slane %v1706, %v1719
        %v1721 = vcombine.low %v1656, %v1672
        %v1722 = vcombine.high %v1656, %v1672
        %v1724 = vunpack.c.l.s4 1934713408
        %v1725 = vunpack.c.0.s8 %v1724
        %v1726 = vlaneseq
        %v1727 = vshrl.u32 %v1726, 7
        %v1728 = vsub.s32 %v1725, %v1727
        %v1729 = vrot.slane %v1721, %v1728
        %v1731 = vunpack.c.l.s4 1934713408
        %v1732 = vunpack.c.0.s8 %v1731
        %v1733 = vlaneseq
        %v1734 = vshrl.u32 %v1733, 7
        %v1735 = vsub.s32 %v1732, %v1734
        %v1736 = vrot.slane %v1722, %v1735
        %v1737 = vcombine.low %v1681, %v1697
        %v1738 = vcombine.high %v1681, %v1697
        %v1740 = vunpack.c.l.s4 1934713408
        %v1741 = vunpack.c.0.s8 %v1740
        %v1742 = vlaneseq
        %v1743 = vshrl.u32 %v1742, 7
        %v1744 = vsub.s32 %v1741, %v1743
        %v1745 = vrot.slane %v1737, %v1744
        %v1747 = vunpack.c.l.s4 1934713408
        %v1748 = vunpack.c.0.s8 %v1747
        %v1749 = vlaneseq
        %v1750 = vshrl.u32 %v1749, 7
        %v1751 = vsub.s32 %v1748, %v1750
        %v1752 = vrot.slane %v1738, %v1751
        %v1753 = vcombine.low %v1688, %v1704
        %v1754 = vcombine.high %v1688, %v1704
        %v1756 = vunpack.c.l.s4 1934713408
        %v1757 = vunpack.c.0.s8 %v1756
        %v1758 = vlaneseq
        %v1759 = vshrl.u32 %v1758, 7
        %v1760 = vsub.s32 %v1757, %v1759
        %v1761 = vrot.slane %v1753, %v1760
        %v1763 = vunpack.c.l.s4 1934713408
        %v1764 = vunpack.c.0.s8 %v1763
        %v1765 = vlaneseq
        %v1766 = vshrl.u32 %v1765, 7
        %v1767 = vsub.s32 %v1764, %v1766
        %v1768 = vrot.slane %v1754, %v1767
        %v1769 = vcombine.low %v1713, %v1745
        %v1770 = vcombine.high %v1713, %v1745
        %v1771 = vcombine.low %v1720, %v1752
        %v1772 = vcombine.high %v1720, %v1752
        %v1773 = vcombine.low %v1729, %v1761
        %v1774 = vcombine.high %v1729, %v1761
        %v1775 = vcombine.low %v1736, %v1768
        %v1776 = vcombine.high %v1736, %v1768
        %v1777 = vcombine.low %v1625, %v1629
        %v1778 = vcombine.high %v1625, %v1629
        %v1780 = vunpack.c.l.s4 1983009808
        %v1781 = vunpack.c.0.s8 %v1780
        %v1782 = vlaneseq
        %v1783 = vshrl.u32 %v1782, 7
        %v1784 = vsub.s32 %v1781, %v1783
        %v1785 = vrot.slane %v1777, %v1784
        %v1787 = vunpack.c.l.s4 1983009808
        %v1788 = vunpack.c.0.s8 %v1787
        %v1789 = vlaneseq
        %v1790 = vshrl.u32 %v1789, 7
        %v1791 = vsub.s32 %v1788, %v1790
        %v1792 = vrot.slane %v1778, %v1791
        %v1793 = vcombine.low %v1627, %v1631
        %v1794 = vcombine.high %v1627, %v1631
        %v1796 = vunpack.c.l.s4 1983009808
        %v1797 = vunpack.c.0.s8 %v1796
        %v1798 = vlaneseq
        %v1799 = vshrl.u32 %v1798, 7
        %v1800 = vsub.s32 %v1797, %v1799
        %v1801 = vrot.slane %v1793, %v1800
        %v1803 = vunpack.c.l.s4 1983009808
        %v1804 = vunpack.c.0.s8 %v1803
        %v1805 = vlaneseq
        %v1806 = vshrl.u32 %v1805, 7
        %v1807 = vsub.s32 %v1804, %v1806
        %v1808 = vrot.slane %v1794, %v1807
        %v1809 = vcombine.low %v1633, %v1637
        %v1810 = vcombine.high %v1633, %v1637
        %v1812 = vunpack.c.l.s4 1983009808
        %v1813 = vunpack.c.0.s8 %v1812
        %v1814 = vlaneseq
        %v1815 = vshrl.u32 %v1814, 7
        %v1816 = vsub.s32 %v1813, %v1815
        %v1817 = vrot.slane %v1809, %v1816
        %v1819 = vunpack.c.l.s4 1983009808
        %v1820 = vunpack.c.0.s8 %v1819
        %v1821 = vlaneseq
        %v1822 = vshrl.u32 %v1821, 7
        %v1823 = vsub.s32 %v1820, %v1822
        %v1824 = vrot.slane %v1810, %v1823
        %v1825 = vcombine.low %v1635, %v1639
        %v1826 = vcombine.high %v1635, %v1639
        %v1828 = vunpack.c.l.s4 1983009808
        %v1829 = vunpack.c.0.s8 %v1828
        %v1830 = vlaneseq
        %v1831 = vshrl.u32 %v1830, 7
        %v1832 = vsub.s32 %v1829, %v1831
        %v1833 = vrot.slane %v1825, %v1832
        %v1835 = vunpack.c.l.s4 1983009808
        %v1836 = vunpack.c.0.s8 %v1835
        %v1837 = vlaneseq
        %v1838 = vshrl.u32 %v1837, 7
        %v1839 = vsub.s32 %v1836, %v1838
        %v1840 = vrot.slane %v1826, %v1839
        %v1841 = vcombine.low %v1785, %v1801
        %v1842 = vcombine.high %v1785, %v1801
        %v1844 = vunpack.c.l.s4 1934713408
        %v1845 = vunpack.c.0.s8 %v1844
        %v1846 = vlaneseq
        %v1847 = vshrl.u32 %v1846, 7
        %v1848 = vsub.s32 %v1845, %v1847
        %v1849 = vrot.slane %v1841, %v1848
        %v1851 = vunpack.c.l.s4 1934713408
        %v1852 = vunpack.c.0.s8 %v1851
        %v1853 = vlaneseq
        %v1854 = vshrl.u32 %v1853, 7
        %v1855 = vsub.s32 %v1852, %v1854
        %v1856 = vrot.slane %v1842, %v1855
        %v1857 = vcombine.low %v1792, %v1808
        %v1858 = vcombine.high %v1792, %v1808
        %v1860 = vunpack.c.l.s4 1934713408
        %v1861 = vunpack.c.0.s8 %v1860
        %v1862 = vlaneseq
        %v1863 = vshrl.u32 %v1862, 7
        %v1864 = vsub.s32 %v1861, %v1863
        %v1865 = vrot.slane %v1857, %v1864
        %v1867 = vunpack.c.l.s4 1934713408
        %v1868 = vunpack.c.0.s8 %v1867
        %v1869 = vlaneseq
        %v1870 = vshrl.u32 %v1869, 7
        %v1871 = vsub.s32 %v1868, %v1870
        %v1872 = vrot.slane %v1858, %v1871
        %v1873 = vcombine.low %v1817, %v1833
        %v1874 = vcombine.high %v1817, %v1833
        %v1876 = vunpack.c.l.s4 1934713408
        %v1877 = vunpack.c.0.s8 %v1876
        %v1878 = vlaneseq
        %v1879 = vshrl.u32 %v1878, 7
        %v1880 = vsub.s32 %v1877, %v1879
        %v1881 = vrot.slane %v1873, %v1880
        %v1883 = vunpack.c.l.s4 1934713408
        %v1884 = vunpack.c.0.s8 %v1883
        %v1885 = vlaneseq
        %v1886 = vshrl.u32 %v1885, 7
        %v1887 = vsub.s32 %v1884, %v1886
        %v1888 = vrot.slane %v1874, %v1887
        %v1889 = vcombine.low %v1824, %v1840
        %v1890 = vcombine.high %v1824, %v1840
        %v1892 = vunpack.c.l.s4 1934713408
        %v1893 = vunpack.c.0.s8 %v1892
        %v1894 = vlaneseq
        %v1895 = vshrl.u32 %v1894, 7
        %v1896 = vsub.s32 %v1893, %v1895
        %v1897 = vrot.slane %v1889, %v1896
        %v1899 = vunpack.c.l.s4 1934713408
        %v1900 = vunpack.c.0.s8 %v1899
        %v1901 = vlaneseq
        %v1902 = vshrl.u32 %v1901, 7
        %v1903 = vsub.s32 %v1900, %v1902
        %v1904 = vrot.slane %v1890, %v1903
        %v1905 = vcombine.low %v1849, %v1881
        %v1906 = vcombine.high %v1849, %v1881
        %v1907 = vcombine.low %v1856, %v1888
        %v1908 = vcombine.high %v1856, %v1888
        %v1909 = vcombine.low %v1865, %v1897
        %v1910 = vcombine.high %v1865, %v1897
        %v1911 = vcombine.low %v1872, %v1904
        %v1912 = vcombine.high %v1872, %v1904
        %v1913 = vcombine.low %v1610, %v1614
        %v1914 = vcombine.high %v1610, %v1614
        %v1916 = vunpack.c.l.s4 1983009808
        %v1917 = vunpack.c.0.s8 %v1916
        %v1918 = vlaneseq
        %v1919 = vshrl.u32 %v1918, 7
        %v1920 = vsub.s32 %v1917, %v1919
        %v1921 = vrot.slane %v1913, %v1920
        %v1923 = vunpack.c.l.s4 1983009808
        %v1924 = vunpack.c.0.s8 %v1923
        %v1925 = vlaneseq
        %v1926 = vshrl.u32 %v1925, 7
        %v1927 = vsub.s32 %v1924, %v1926
        %v1928 = vrot.slane %v1914, %v1927
        %v1929 = vcombine.low %v1612, %v1616
        %v1930 = vcombine.high %v1612, %v1616
        %v1932 = vunpack.c.l.s4 1983009808
        %v1933 = vunpack.c.0.s8 %v1932
        %v1934 = vlaneseq
        %v1935 = vshrl.u32 %v1934, 7
        %v1936 = vsub.s32 %v1933, %v1935
        %v1937 = vrot.slane %v1929, %v1936
        %v1939 = vunpack.c.l.s4 1983009808
        %v1940 = vunpack.c.0.s8 %v1939
        %v1941 = vlaneseq
        %v1942 = vshrl.u32 %v1941, 7
        %v1943 = vsub.s32 %v1940, %v1942
        %v1944 = vrot.slane %v1930, %v1943
        %v1945 = vcombine.low %v1618, %v1622
        %v1946 = vcombine.high %v1618, %v1622
        %v1948 = vunpack.c.l.s4 1983009808
        %v1949 = vunpack.c.0.s8 %v1948
        %v1950 = vlaneseq
        %v1951 = vshrl.u32 %v1950, 7
        %v1952 = vsub.s32 %v1949, %v1951
        %v1953 = vrot.slane %v1945, %v1952
        %v1955 = vunpack.c.l.s4 1983009808
        %v1956 = vunpack.c.0.s8 %v1955
        %v1957 = vlaneseq
        %v1958 = vshrl.u32 %v1957, 7
        %v1959 = vsub.s32 %v1956, %v1958
        %v1960 = vrot.slane %v1946, %v1959
        %v1961 = vcombine.low %v1620, %v1624
        %v1962 = vcombine.high %v1620, %v1624
        %v1964 = vunpack.c.l.s4 1983009808
        %v1965 = vunpack.c.0.s8 %v1964
        %v1966 = vlaneseq
        %v1967 = vshrl.u32 %v1966, 7
        %v1968 = vsub.s32 %v1965, %v1967
        %v1969 = vrot.slane %v1961, %v1968
        %v1971 = vunpack.c.l.s4 1983009808
        %v1972 = vunpack.c.0.s8 %v1971
        %v1973 = vlaneseq
        %v1974 = vshrl.u32 %v1973, 7
        %v1975 = vsub.s32 %v1972, %v1974
        %v1976 = vrot.slane %v1962, %v1975
        %v1977 = vcombine.low %v1921, %v1937
        %v1978 = vcombine.high %v1921, %v1937
        %v1980 = vunpack.c.l.s4 1934713408
        %v1981 = vunpack.c.0.s8 %v1980
        %v1982 = vlaneseq
        %v1983 = vshrl.u32 %v1982, 7
        %v1984 = vsub.s32 %v1981, %v1983
        %v1985 = vrot.slane %v1977, %v1984
        %v1987 = vunpack.c.l.s4 1934713408
        %v1988 = vunpack.c.0.s8 %v1987
        %v1989 = vlaneseq
        %v1990 = vshrl.u32 %v1989, 7
        %v1991 = vsub.s32 %v1988, %v1990
        %v1992 = vrot.slane %v1978, %v1991
        %v1993 = vcombine.low %v1928, %v1944
        %v1994 = vcombine.high %v1928, %v1944
        %v1996 = vunpack.c.l.s4 1934713408
        %v1997 = vunpack.c.0.s8 %v1996
        %v1998 = vlaneseq
        %v1999 = vshrl.u32 %v1998, 7
        %v2000 = vsub.s32 %v1997, %v1999
        %v2001 = vrot.slane %v1993, %v2000
        %v2003 = vunpack.c.l.s4 1934713408
        %v2004 = vunpack.c.0.s8 %v2003
        %v2005 = vlaneseq
        %v2006 = vshrl.u32 %v2005, 7
        %v2007 = vsub.s32 %v2004, %v2006
        %v2008 = vrot.slane %v1994, %v2007
        %v2009 = vcombine.low %v1953, %v1969
        %v2010 = vcombine.high %v1953, %v1969
        %v2012 = vunpack.c.l.s4 1934713408
        %v2013 = vunpack.c.0.s8 %v2012
        %v2014 = vlaneseq
        %v2015 = vshrl.u32 %v2014, 7
        %v2016 = vsub.s32 %v2013, %v2015
        %v2017 = vrot.slane %v2009, %v2016
        %v2019 = vunpack.c.l.s4 1934713408
        %v2020 = vunpack.c.0.s8 %v2019
        %v2021 = vlaneseq
        %v2022 = vshrl.u32 %v2021, 7
        %v2023 = vsub.s32 %v2020, %v2022
        %v2024 = vrot.slane %v2010, %v2023
        %v2025 = vcombine.low %v1960, %v1976
        %v2026 = vcombine.high %v1960, %v1976
        %v2028 = vunpack.c.l.s4 1934713408
        %v2029 = vunpack.c.0.s8 %v2028
        %v2030 = vlaneseq
        %v2031 = vshrl.u32 %v2030, 7
        %v2032 = vsub.s32 %v2029, %v2031
        %v2033 = vrot.slane %v2025, %v2032
        %v2035 = vunpack.c.l.s4 1934713408
        %v2036 = vunpack.c.0.s8 %v2035
        %v2037 = vlaneseq
        %v2038 = vshrl.u32 %v2037, 7
        %v2039 = vsub.s32 %v2036, %v2038
        %v2040 = vrot.slane %v2026, %v2039
        %v2041 = vcombine.low %v1985, %v2017
        %v2042 = vcombine.high %v1985, %v2017
        %v2043 = vcombine.low %v1992, %v2024
        %v2044 = vcombine.high %v1992, %v2024
        %v2045 = vcombine.low %v2001, %v2033
        %v2046 = vcombine.high %v2001, %v2033
        %v2047 = vcombine.low %v2008, %v2040
        %v2048 = vcombine.high %v2008, %v2040
        %v2049 = vcombine.low %v1626, %v1630
        %v2050 = vcombine.high %v1626, %v1630
        %v2052 = vunpack.c.l.s4 1983009808
        %v2053 = vunpack.c.0.s8 %v2052
        %v2054 = vlaneseq
        %v2055 = vshrl.u32 %v2054, 7
        %v2056 = vsub.s32 %v2053, %v2055
        %v2057 = vrot.slane %v2049, %v2056
        %v2059 = vunpack.c.l.s4 1983009808
        %v2060 = vunpack.c.0.s8 %v2059
        %v2061 = vlaneseq
        %v2062 = vshrl.u32 %v2061, 7
        %v2063 = vsub.s32 %v2060, %v2062
        %v2064 = vrot.slane %v2050, %v2063
        %v2065 = vcombine.low %v1628, %v1632
        %v2066 = vcombine.high %v1628, %v1632
        %v2068 = vunpack.c.l.s4 1983009808
        %v2069 = vunpack.c.0.s8 %v2068
        %v2070 = vlaneseq
        %v2071 = vshrl.u32 %v2070, 7
        %v2072 = vsub.s32 %v2069, %v2071
        %v2073 = vrot.slane %v2065, %v2072
        %v2075 = vunpack.c.l.s4 1983009808
        %v2076 = vunpack.c.0.s8 %v2075
        %v2077 = vlaneseq
        %v2078 = vshrl.u32 %v2077, 7
        %v2079 = vsub.s32 %v2076, %v2078
        %v2080 = vrot.slane %v2066, %v2079
        %v2081 = vcombine.low %v1634, %v1638
        %v2082 = vcombine.high %v1634, %v1638
        %v2084 = vunpack.c.l.s4 1983009808
        %v2085 = vunpack.c.0.s8 %v2084
        %v2086 = vlaneseq
        %v2087 = vshrl.u32 %v2086, 7
        %v2088 = vsub.s32 %v2085, %v2087
        %v2089 = vrot.slane %v2081, %v2088
        %v2091 = vunpack.c.l.s4 1983009808
        %v2092 = vunpack.c.0.s8 %v2091
        %v2093 = vlaneseq
        %v2094 = vshrl.u32 %v2093, 7
        %v2095 = vsub.s32 %v2092, %v2094
        %v2096 = vrot.slane %v2082, %v2095
        %v2097 = vcombine.low %v1636, %v1640
        %v2098 = vcombine.high %v1636, %v1640
        %v2100 = vunpack.c.l.s4 1983009808
        %v2101 = vunpack.c.0.s8 %v2100
        %v2102 = vlaneseq
        %v2103 = vshrl.u32 %v2102, 7
        %v2104 = vsub.s32 %v2101, %v2103
        %v2105 = vrot.slane %v2097, %v2104
        %v2107 = vunpack.c.l.s4 1983009808
        %v2108 = vunpack.c.0.s8 %v2107
        %v2109 = vlaneseq
        %v2110 = vshrl.u32 %v2109, 7
        %v2111 = vsub.s32 %v2108, %v2110
        %v2112 = vrot.slane %v2098, %v2111
        %v2113 = vcombine.low %v2057, %v2073
        %v2114 = vcombine.high %v2057, %v2073
        %v2116 = vunpack.c.l.s4 1934713408
        %v2117 = vunpack.c.0.s8 %v2116
        %v2118 = vlaneseq
        %v2119 = vshrl.u32 %v2118, 7
        %v2120 = vsub.s32 %v2117, %v2119
        %v2121 = vrot.slane %v2113, %v2120
        %v2123 = vunpack.c.l.s4 1934713408
        %v2124 = vunpack.c.0.s8 %v2123
        %v2125 = vlaneseq
        %v2126 = vshrl.u32 %v2125, 7
        %v2127 = vsub.s32 %v2124, %v2126
        %v2128 = vrot.slane %v2114, %v2127
        %v2129 = vcombine.low %v2064, %v2080
        %v2130 = vcombine.high %v2064, %v2080
        %v2132 = vunpack.c.l.s4 1934713408
        %v2133 = vunpack.c.0.s8 %v2132
        %v2134 = vlaneseq
        %v2135 = vshrl.u32 %v2134, 7
        %v2136 = vsub.s32 %v2133, %v2135
        %v2137 = vrot.slane %v2129, %v2136
        %v2139 = vunpack.c.l.s4 1934713408
        %v2140 = vunpack.c.0.s8 %v2139
        %v2141 = vlaneseq
        %v2142 = vshrl.u32 %v2141, 7
        %v2143 = vsub.s32 %v2140, %v2142
        %v2144 = vrot.slane %v2130, %v2143
        %v2145 = vcombine.low %v2089, %v2105
        %v2146 = vcombine.high %v2089, %v2105
        %v2148 = vunpack.c.l.s4 1934713408
        %v2149 = vunpack.c.0.s8 %v2148
        %v2150 = vlaneseq
        %v2151 = vshrl.u32 %v2150, 7
        %v2152 = vsub.s32 %v2149, %v2151
        %v2153 = vrot.slane %v2145, %v2152
        %v2155 = vunpack.c.l.s4 1934713408
        %v2156 = vunpack.c.0.s8 %v2155
        %v2157 = vlaneseq
        %v2158 = vshrl.u32 %v2157, 7
        %v2159 = vsub.s32 %v2156, %v2158
        %v2160 = vrot.slane %v2146, %v2159
        %v2161 = vcombine.low %v2096, %v2112
        %v2162 = vcombine.high %v2096, %v2112
        %v2164 = vunpack.c.l.s4 1934713408
        %v2165 = vunpack.c.0.s8 %v2164
        %v2166 = vlaneseq
        %v2167 = vshrl.u32 %v2166, 7
        %v2168 = vsub.s32 %v2165, %v2167
        %v2169 = vrot.slane %v2161, %v2168
        %v2171 = vunpack.c.l.s4 1934713408
        %v2172 = vunpack.c.0.s8 %v2171
        %v2173 = vlaneseq
        %v2174 = vshrl.u32 %v2173, 7
        %v2175 = vsub.s32 %v2172, %v2174
        %v2176 = vrot.slane %v2162, %v2175
        %v2177 = vcombine.low %v2121, %v2153
        %v2178 = vcombine.high %v2121, %v2153
        %v2179 = vcombine.low %v2128, %v2160
        %v2180 = vcombine.high %v2128, %v2160
        %v2181 = vcombine.low %v2137, %v2169
        %v2182 = vcombine.high %v2137, %v2169
        %v2183 = vcombine.low %v2144, %v2176
        %v2184 = vcombine.high %v2144, %v2176
        %2187 = vrot.lane.b32.xlu0 %v1770, 2
        %v2188 = vpop.permute.xlu0 %2187
        %2189 = vrot.lane.b32.xlu0 %v1906, 2
        %v2190 = vpop.permute.xlu0 %2189
        %2195 = vrot.lane.b32.xlu0 %v1771, 4
        %v2196 = vpop.permute.xlu0 %2195
        %2197 = vrot.lane.b32.xlu0 %v1907, 4
        %v2198 = vpop.permute.xlu0 %2197
        %2203 = vrot.lane.b32.xlu0 %v1772, 6
        %v2204 = vpop.permute.xlu0 %2203
        %2205 = vrot.lane.b32.xlu0 %v1908, 6
        %v2206 = vpop.permute.xlu0 %2205
        %2211 = vrot.lane.b32.xlu0 %v1773, 8
        %v2212 = vpop.permute.xlu0 %2211
        %2213 = vrot.lane.b32.xlu0 %v1909, 8
        %v2214 = vpop.permute.xlu0 %2213
        %2219 = vrot.lane.b32.xlu0 %v1774, 10
        %v2220 = vpop.permute.xlu0 %2219
        %2221 = vrot.lane.b32.xlu0 %v1910, 10
        %v2222 = vpop.permute.xlu0 %2221
        %2227 = vrot.lane.b32.xlu0 %v1775, 12
        %v2228 = vpop.permute.xlu0 %2227
        %2229 = vrot.lane.b32.xlu0 %v1911, 12
        %v2230 = vpop.permute.xlu0 %2229
        %2235 = vrot.lane.b32.xlu0 %v1776, 14
        %v2236 = vpop.permute.xlu0 %2235
        %2237 = vrot.lane.b32.xlu0 %v1912, 14
        %v2238 = vpop.permute.xlu0 %2237
        %2243 = vrot.lane.b32.xlu0 %v2041, 16
        %v2244 = vpop.permute.xlu0 %2243
        %2245 = vrot.lane.b32.xlu0 %v2177, 16
        %v2246 = vpop.permute.xlu0 %2245
        %2251 = vrot.lane.b32.xlu0 %v2042, 18
        %v2252 = vpop.permute.xlu0 %2251
        %2253 = vrot.lane.b32.xlu0 %v2178, 18
        %v2254 = vpop.permute.xlu0 %2253
        %2259 = vrot.lane.b32.xlu0 %v2043, 20
        %v2260 = vpop.permute.xlu0 %2259
        %2261 = vrot.lane.b32.xlu0 %v2179, 20
        %v2262 = vpop.permute.xlu0 %2261
        %2267 = vrot.lane.b32.xlu0 %v2044, 22
        %v2268 = vpop.permute.xlu0 %2267
        %2269 = vrot.lane.b32.xlu0 %v2180, 22
        %v2270 = vpop.permute.xlu0 %2269
        %2275 = vrot.lane.b32.xlu0 %v2045, 24
        %v2276 = vpop.permute.xlu0 %2275
        %2277 = vrot.lane.b32.xlu0 %v2181, 24
        %v2278 = vpop.permute.xlu0 %2277
        %2283 = vrot.lane.b32.xlu0 %v2046, 26
        %v2284 = vpop.permute.xlu0 %2283
        %2285 = vrot.lane.b32.xlu0 %v2182, 26
        %v2286 = vpop.permute.xlu0 %2285
        %2291 = vrot.lane.b32.xlu0 %v2047, 28
        %v2292 = vpop.permute.xlu0 %2291
        %2293 = vrot.lane.b32.xlu0 %v2183, 28
        %v2294 = vpop.permute.xlu0 %2293
        %2299 = vrot.lane.b32.xlu0 %v2048, 30
        %v2300 = vpop.permute.xlu0 %2299
        %2301 = vrot.lane.b32.xlu0 %v2184, 30
        %v2302 = vpop.permute.xlu0 %2301
        %v2305 = vsel %vm1212, %v1769, %v2188
        %v2306 = vsel %vm1212, %v1905, %v2190
        %v2307 = vsel %vm1215, %v2305, %v2196
        %v2308 = vsel %vm1215, %v2306, %v2198
        %v2309 = vsel %vm1218, %v2307, %v2204
        %v2310 = vsel %vm1218, %v2308, %v2206
        %v2311 = vsel %vm1221, %v2309, %v2212
        %v2312 = vsel %vm1221, %v2310, %v2214
        %v2313 = vsel %vm1224, %v2311, %v2220
        %v2314 = vsel %vm1224, %v2312, %v2222
        %v2315 = vsel %vm1227, %v2313, %v2228
        %v2316 = vsel %vm1227, %v2314, %v2230
        %v2317 = vsel %vm1230, %v2315, %v2236
        %v2318 = vsel %vm1230, %v2316, %v2238
        %v2319 = vsel %vm1233, %v2317, %v2244
        %v2320 = vsel %vm1233, %v2318, %v2246
        %v2321 = vsel %vm1236, %v2319, %v2252
        %v2322 = vsel %vm1236, %v2320, %v2254
        %v2323 = vsel %vm1239, %v2321, %v2260
        %v2324 = vsel %vm1239, %v2322, %v2262
        %v2325 = vsel %vm1242, %v2323, %v2268
        %v2326 = vsel %vm1242, %v2324, %v2270
        %v2327 = vsel %vm1245, %v2325, %v2276
        %v2328 = vsel %vm1245, %v2326, %v2278
        %v2329 = vsel %vm1248, %v2327, %v2284
        %v2330 = vsel %vm1248, %v2328, %v2286
        %v2331 = vsel %vm1251, %v2329, %v2292
        %v2332 = vsel %vm1251, %v2330, %v2294
        %v2333 = vsel %vm1254, %v2331, %v2300
        %v2334 = vsel %vm1254, %v2332, %v2302
        %2337 = vrot.lane.b32.xlu0 %v2333, 32
        %v2338 = vpop.permute.xlu0 %2337
        %2339 = vrot.lane.b32.xlu0 %v2334, 32
        %v2340 = vpop.permute.xlu0 %2339
        %vm2343 = vcmask 261120
        %v2344 = vsel %vm2343, %v1255, %v2338
        %v2345 = vsel %vm2343, %v1256, %v2340
        %vm2346 = vcmask 523264
        %2347 = vst.msk [vmem:[%s153] sm:$0xff] %vm2346, %v2344
        %2348 = vst.msk [vmem:[%s153 + $0x8] sm:$0xff] %vm2346, %v2345
        %s2349 = sand.u32 %s68, 1
        %s2350 = scalar_lea.sflag [#allocation4], %s2349
        %s2351 = sand.u32 %s68, 1
        %s2352 = smul.addr %s2351, 16
        %s2353 = scalar_lea.vmem [#allocation5], %s2352
        // Predicated region
        $region29: #{tpu_custom_call.1} parent=23 // pred_check
          %p2354 = pneg %p78
        $region30: #{tpu_custom_call.1} parent=23 // pred_check_branch
          %2356 = sbr.rel (%p2354) target = $region32
        $region31: #{tpu_custom_call.1} parent=23 // pred_region
          %s2358 = ssub.s32 256, 256
          %2359 = vsyncadd %s2350, %s2358
          %s2360 = smul.addr %s23, 2
          %s2361 = smul.addr %s22, 2
          %s2362 = sadd.s32 %s2360, %s2361
          %s2363 = smul.addr %s2362, 128
          %s2364 = scalar_lea.hbm %s1, %s2363
          %s2365 = sshll.u32 %s2353, 4
          %s2366 = int_to_ptr.vmem [resolvable:$true] %s2365
          %2371 = dma.vmem_to_hbm [thread:$0]  %s2366, 256, %s2364, %s2350, 128, 128, 8
        $region32: #{tpu_custom_call.1} parent=23 // pred_fallthru
          _
      $region24: #{tpu_custom_call.1} parent=5 // pred_fallthru
        _
      %p2372 = scmp.le.s32.totalorder 2, %s13
      // Predicated region
      $region33: #{tpu_custom_call.1} parent=5 // pred_check
        %p2373 = pneg %p2372
      $region34: #{tpu_custom_call.1} parent=5 // pred_check_branch
        %2375 = sbr.rel (%p2373) target = $region36
      $region35: #{tpu_custom_call.1} parent=5 // pred_region
        %s2376 = ssub.s32 %s13, 2
        // Predicated region
        $region37: #{tpu_custom_call.1} parent=35 // pred_check
          %p2377 = pneg %p84
        $region38: #{tpu_custom_call.1} parent=35 // pred_check_branch
          %2379 = sbr.rel (%p2377) target = $region40
        $region39: #{tpu_custom_call.1} parent=35 // pred_region
          %s2380 = sand.u32 %s69, 1
          %s2381 = scalar_lea.sflag [#allocation4], %s2380
          %s2382 = sand.u32 %s69, 1
          %s2383 = smul.addr %s2382, 16
          %s2384 = scalar_lea.vmem [#allocation5], %s2383
          %2385 = dma.done %s2381, 256
        $region40: #{tpu_custom_call.1} parent=35 // pred_fallthru
          _
      $region36: #{tpu_custom_call.1} parent=5 // pred_fallthru
        _
    $region6: #{tpu_custom_call.1} parent=1 // loop_footer
      %s17 = sadd.s32 1, %s13
    $region7: #{tpu_custom_call.1} parent=1 // loop_footer_branch
      %12 = sbr.rel target = $region3
    $region8: #{tpu_custom_call.1} parent=1 // loop_exit
      _
    %2386 = vsyncpa [#allocation3], 1
    %s2387 = scalar_lea.sflag [#allocation3], 1
    %2388 = vsyncpa %s2387, 1
    %2389 = vsyncpa [#allocation4], 1
    %s2390 = scalar_lea.sflag [#allocation4], 1
    %2391 = vsyncpa %s2390, 1

</llo_original>
